<compile_context>
chip_gen: v7x
topology: tpu7x:2x2x1
jax: 0.10.0
libtpu: 0.0.40
codegen_flags: <defaults>
</compile_context>

<pallas_src>
import functools

import jax
import jax.numpy as jnp
from jax.experimental import pallas as pl
from jax.experimental.pallas import tpu as pltpu

EMB_DIM = 100
HIDDEN = 100
NUM_CLASSES = 2

# Padded / fused compute sizes (vreg & MXU aligned).
E_PAD = 128
H_PAD = 128
GATES = 4 * H_PAD            # 512 = fused i|f|g|o
OUT_PAD = 128                # lane-dense logits block
T_TILE_MAX = 32              # timesteps per grid step
B_TILE_MAX = 64              # batch rows per grid step (parallel axis on v7x)
B_MIN = 8                    # sublane multiple


def _lstm_net_kernel(x_ref,     # (t_tile*b_tile, E_PAD) bf16, row = t*b_tile+b
                     wx_ref,    # (E_PAD, GATES)   bf16  fused input weights
                     wh_ref,    # (H_PAD, GATES)   bf16  fused hidden weights
                     b_ref,     # (1, GATES)       f32   fused bias (b_ih+b_hh)
                     fcw_ref,   # (H_PAD, OUT_PAD) f32
                     fcb_ref,   # (1, OUT_PAD)     f32
                     out_ref,   # (b_tile, OUT_PAD) f32
                     h_s, c_s, acc_s,   # (b_tile, H_PAD) f32 carried state
                     xproj_s,           # (t_tile*b_tile, GATES) f32
                     *, seq_len, t_tile):
    n_b = h_s.shape[0]
    h_pad = wh_ref.shape[0]
    n_t_tiles = (seq_len + t_tile - 1) // t_tile
    # Number of valid (non-padded) timesteps in the last time tile.
    n_valid_tail = seq_len - (n_t_tiles - 1) * t_tile
    ti = pl.program_id(1)

    @pl.when(ti == 0)
    def _init():
        h_s[...] = jnp.zeros_like(h_s)
        c_s[...] = jnp.zeros_like(c_s)
        acc_s[...] = jnp.zeros_like(acc_s)

    # ---- Stage 1: input projection for the whole tile as one wide bf16 matmul
    # (f32 accumulation), bias folded once.
    xproj_s[...] = (jnp.dot(x_ref[...], wx_ref[...],
                            preferred_element_type=jnp.float32)
                    + b_ref[...])

    # Padded timesteps can only occur in the last time tile; mask only there.
    need_runtime_mask = (n_t_tiles > 1) and (n_valid_tail < t_tile)
    if need_runtime_mask:
        pad_scale = jnp.where(ti == n_t_tiles - 1, 0.0, 1.0).astype(jnp.float32)

    # ---- Stage 2: serial recurrence, fully unrolled at trace time; one small
    # bf16 (b_tile,128)x(128,512) matmul per step, all gate math in f32.
    h = h_s[...]
    c = c_s[...]
    acc = acc_s[...]
    for t in range(t_tile):
        row0 = t * n_b                                   # static, 8-aligned
        gates = (xproj_s[pl.ds(row0, n_b), :]
                 + jnp.dot(h.astype(jnp.bfloat16), wh_ref[...],
                           preferred_element_type=jnp.float32))   # (b_tile, 4H)
        i_g = jax.nn.sigmoid(gates[:, 0 * h_pad:1 * h_pad])
        f_g = jax.nn.sigmoid(gates[:, 1 * h_pad:2 * h_pad])
        g_g = jnp.tanh(gates[:, 2 * h_pad:3 * h_pad])
        o_g = jax.nn.sigmoid(gates[:, 3 * h_pad:4 * h_pad])
        c = f_g * c + i_g * g_g
        h = o_g * jnp.tanh(c)
        if t < n_valid_tail:
            acc = acc + h                    # valid in every tile: no masking
        elif need_runtime_mask:
            acc = acc + pad_scale * h        # valid only in non-tail tiles
        # else: padded step of the single (tail) tile -> dropped at trace time.
    h_s[...] = h
    c_s[...] = c
    acc_s[...] = acc

    # ---- Finalize: mean over time + FC, lane-dense (b_tile, 128) store.
    @pl.when(ti == n_t_tiles - 1)
    def _fini():
        mean_h = acc * (1.0 / seq_len)
        out_ref[...] = (jnp.dot(mean_h, fcw_ref[...],
                                preferred_element_type=jnp.float32)
                        + fcb_ref[...])


def pack_params(params):
    """Zero-pad to (8,128)-aligned shapes, fuse gates (i|f|g|o), bf16 MXU operands."""
    def pad2(w, rows, cols):
        out = jnp.zeros((rows, cols), jnp.float32)
        return out.at[:w.shape[0], :w.shape[1]].set(w.astype(jnp.float32))

    wx = jnp.concatenate([pad2(params[k], E_PAD, H_PAD)
                          for k in ("wxi", "wxf", "wxg", "wxo")], axis=1)
    wh = jnp.concatenate([pad2(params[k], H_PAD, H_PAD)
                          for k in ("whi", "whf", "whg", "who")], axis=1)
    b = jnp.concatenate([pad2(params[k], 1, H_PAD)
                         for k in ("bi", "bf", "bg", "bo")], axis=1)
    emb = jnp.zeros((params["emb"].shape[0], E_PAD), jnp.float32)
    emb = emb.at[:, :EMB_DIM].set(params["emb"].astype(jnp.float32))
    return dict(emb=emb.astype(jnp.bfloat16),           # bf16 x stream
                wx=wx.astype(jnp.bfloat16),              # bf16 MXU operands,
                wh=wh.astype(jnp.bfloat16),              # f32 accumulation
                b=b,                                     # bias stays f32
                fcw=pad2(params["fc_w"], H_PAD, OUT_PAD),
                fcb=pad2(params["fc_b"], 1, OUT_PAD))


@jax.jit
def lstm_net_forward(tokens, packed):
    """tokens: (B, T) int32  ->  logits (B, NUM_CLASSES) f32."""
    B, T = tokens.shape

    # Batch tiling: one tile for small batches; 64-row tiles (split across the
    # two v7x TensorCores via the "parallel" grid axis) for large ones.
    if B <= B_TILE_MAX:
        b_tile = max(B_MIN, ((B + B_MIN - 1) // B_MIN) * B_MIN)
        Bp = b_tile
    else:
        b_tile = B_TILE_MAX
        Bp = ((B + B_TILE_MAX - 1) // B_TILE_MAX) * B_TILE_MAX
    n_btiles = Bp // b_tile

    # Time tiling: up to T_TILE_MAX steps per grid step (exact tile for short T).
    t_tile = T if T <= T_TILE_MAX else T_TILE_MAX
    Tp = ((T + t_tile - 1) // t_tile) * t_tile
    n_t_tiles = Tp // t_tile

    # Pad ids and gather the embeddings directly into the kernel's blocked,
    # time-major layout: (n_btiles, n_t_tiles, t_tile*b_tile, E_PAD) bf16.
    tok_p = jnp.zeros((Bp, Tp), tokens.dtype).at[:B, :T].set(tokens)
    ids = (tok_p.reshape(n_btiles, b_tile, n_t_tiles, t_tile)
           .transpose(0, 2, 3, 1)                        # (bi, ti, t, b)
           .reshape(n_btiles, n_t_tiles, t_tile * b_tile))
    x = jnp.take(packed["emb"], ids, axis=0)             # bf16

    kernel = functools.partial(_lstm_net_kernel, seq_len=T, t_tile=t_tile)
    grid_spec = pltpu.PrefetchScalarGridSpec(
        num_scalar_prefetch=0,
        grid=(n_btiles, n_t_tiles),
        in_specs=[
            pl.BlockSpec((None, None, t_tile * b_tile, E_PAD),
                         lambda bi, ti: (bi, ti, 0, 0)),
            pl.BlockSpec((E_PAD, GATES), lambda bi, ti: (0, 0)),
            pl.BlockSpec((H_PAD, GATES), lambda bi, ti: (0, 0)),
            pl.BlockSpec((1, GATES), lambda bi, ti: (0, 0)),
            pl.BlockSpec((H_PAD, OUT_PAD), lambda bi, ti: (0, 0)),
            pl.BlockSpec((1, OUT_PAD), lambda bi, ti: (0, 0)),
        ],
        out_specs=pl.BlockSpec((b_tile, OUT_PAD), lambda bi, ti: (bi, 0)),
        scratch_shapes=[
            pltpu.VMEM((b_tile, H_PAD), jnp.float32),           # h
            pltpu.VMEM((b_tile, H_PAD), jnp.float32),           # c
            pltpu.VMEM((b_tile, H_PAD), jnp.float32),           # sum_t h
            pltpu.VMEM((t_tile * b_tile, GATES), jnp.float32),  # xproj tile
        ],
    )
    out = pl.pallas_call(
        kernel,
        out_shape=jax.ShapeDtypeStruct((Bp, OUT_PAD), jnp.float32),
        grid_spec=grid_spec,
        compiler_params=pltpu.CompilerParams(
            dimension_semantics=("parallel", "arbitrary"),
            vmem_limit_bytes=32 * 1024 * 1024),
    )(x, packed["wx"], packed["wh"], packed["b"],
      packed["fcw"], packed["fcb"])
    return out[:B, :NUM_CLASSES]


def init_params(key, vocab_size):
    ks = jax.random.split(key, 16)
    E, H, C = EMB_DIM, HIDDEN, NUM_CLASSES
    s = 0.1

    def rnd(k, shape):
        return jax.random.normal(k, shape, jnp.float32) * s

    # PyTorch nn.LSTM stores W_ih (4H, E), W_hh (4H, H), b_ih (4H,), b_hh (4H,)
    # with gate order i, f, g, o.  Here we keep per-gate (E,H)/(H,H) matrices
    # (already transposed for x @ W) and fold b_ih + b_hh into one bias.
    params = dict(
        emb=rnd(ks[0], (vocab_size + 4, E)),
        wxi=rnd(ks[1], (E, H)), wxf=rnd(ks[2], (E, H)),
        wxg=rnd(ks[3], (E, H)), wxo=rnd(ks[4], (E, H)),
        whi=rnd(ks[5], (H, H)), whf=rnd(ks[6], (H, H)),
        whg=rnd(ks[7], (H, H)), who=rnd(ks[8], (H, H)),
        bi=rnd(ks[9], (1, H)) + rnd(ks[10], (1, H)),
        bf=rnd(ks[11], (1, H)) + rnd(ks[12], (1, H)),
        bg=rnd(ks[13], (1, H)) + rnd(ks[14], (1, H)),
        bo=rnd(ks[15], (1, H)) + rnd(jax.random.fold_in(key, 99), (1, H)),
        fc_w=rnd(jax.random.fold_in(key, 100), (H, C)),
        fc_b=rnd(jax.random.fold_in(key, 101), (1, C)),
    )
    return params


def reference_forward(tokens, params):
    """Pure-JAX f32 reference of the same forward pass (for verification)."""
    emb = jnp.take(params["emb"], tokens, axis=0)
    x = jnp.transpose(emb, (1, 0, 2)).astype(jnp.float32)   # (T, B, E)
    T, B, _ = x.shape
    H = HIDDEN
    h = jnp.zeros((B, H), jnp.float32)
    c = jnp.zeros((B, H), jnp.float32)
    outs = []
    for t in range(T):
        x_t = x[t]
        i_g = jax.nn.sigmoid(x_t @ params["wxi"] + h @ params["whi"] + params["bi"])
        f_g = jax.nn.sigmoid(x_t @ params["wxf"] + h @ params["whf"] + params["bf"])
        g_g = jnp.tanh(x_t @ params["wxg"] + h @ params["whg"] + params["bg"])
        o_g = jax.nn.sigmoid(x_t @ params["wxo"] + h @ params["who"] + params["bo"])
        c = f_g * c + i_g * g_g
        h = o_g * jnp.tanh(c)
        outs.append(h)
    mean_h = jnp.mean(jnp.stack(outs, 0), axis=0)
    return mean_h @ params["fc_w"] + params["fc_b"]


if __name__ == "__main__":
    key = jax.random.PRNGKey(0)
    vocab_size = 1000           # small synthetic vocab (module default 10000)

    pkey, tkey1, tkey2, tkey3 = jax.random.split(key, 4)
    params = init_params(pkey, vocab_size)
    packed = pack_params(params)

    # bf16 MXU operands (f32 accumulation / gate math) vs. the f32 reference.
    ATOL = RTOL = 2e-2

    # Case 1 (module-like tiny shapes): B=2, T=8 -> single tile on both axes.
    B, T = 2, 8
    tokens = jax.random.randint(tkey1, (B, T), 0, vocab_size + 4, dtype=jnp.int32)
    out = jax.block_until_ready(lstm_net_forward(tokens, packed))
    ref = reference_forward(tokens, params)
    assert out.shape == (B, NUM_CLASSES)
    assert jnp.allclose(out, ref, atol=ATOL, rtol=RTOL), (out, ref)

    # Case 2: batch padding (B=5 -> 8), exact time tile (T=20).
    B2, T2 = 5, 20
    tokens2 = jax.random.randint(tkey2, (B2, T2), 0, vocab_size + 4, dtype=jnp.int32)
    out2 = jax.block_until_ready(lstm_net_forward(tokens2, packed))
    ref2 = reference_forward(tokens2, params)
    assert out2.shape == (B2, NUM_CLASSES)
    assert jnp.allclose(out2, ref2, atol=ATOL, rtol=RTOL), (out2, ref2)

    # Case 3: multi time-tile grid with tail masking (T=40 -> 2 tiles of 32).
    B3, T3 = 10, 40
    tokens3 = jax.random.randint(tkey3, (B3, T3), 0, vocab_size + 4, dtype=jnp.int32)
    out3 = jax.block_until_ready(lstm_net_forward(tokens3, packed))
    ref3 = reference_forward(tokens3, params)
    assert out3.shape == (B3, NUM_CLASSES)
    assert jnp.allclose(out3, ref3, atol=ATOL, rtol=RTOL), (out3, ref3)

    print("KERNEL_OK")
</pallas_src>

<mosaic_0001>
module attributes {stable_mosaic.version = 11 : i64} {
  func.func @_lstm_net_kernel(%arg0: i32, %arg1: i32, %arg2: memref<1x1x64x128xbf16, #tpu.memory_space<vmem>>, %arg3: memref<128x512xbf16, #tpu.memory_space<vmem>>, %arg4: memref<128x512xbf16, #tpu.memory_space<vmem>>, %arg5: memref<1x512xf32, #tpu.memory_space<vmem>>, %arg6: memref<128x128xf32, #tpu.memory_space<vmem>>, %arg7: memref<1x128xf32, #tpu.memory_space<vmem>>, %arg8: memref<8x128xf32, #tpu.memory_space<vmem>>, %arg9: memref<8x128xf32, #tpu.memory_space<vmem>>, %arg10: memref<8x128xf32, #tpu.memory_space<vmem>>, %arg11: memref<8x128xf32, #tpu.memory_space<vmem>>, %arg12: memref<64x512xf32, #tpu.memory_space<vmem>>) attributes {dimension_semantics = [#tpu.dimension_semantics<parallel>, #tpu.dimension_semantics<arbitrary>], iteration_bounds = array<i64: 1, 1>, scalar_prefetch = 0 : i64, scratch_operands = 4 : i64, tpu.core_type = #tpu.core_type<tc>, window_params = [{transform_indices = @transform_0, window_bounds = array<i64: 1, 1, 64, 128>}, {pipeline_mode = #tpu.pipeline_mode<synchronous>, transform_indices = @transform_1, window_bounds = array<i64: 128, 512>}, {pipeline_mode = #tpu.pipeline_mode<synchronous>, transform_indices = @transform_2, window_bounds = array<i64: 128, 512>}, {pipeline_mode = #tpu.pipeline_mode<synchronous>, transform_indices = @transform_3, window_bounds = array<i64: 1, 512>}, {pipeline_mode = #tpu.pipeline_mode<synchronous>, transform_indices = @transform_4, window_bounds = array<i64: 128, 128>}, {pipeline_mode = #tpu.pipeline_mode<synchronous>, transform_indices = @transform_5, window_bounds = array<i64: 1, 128>}, {transform_indices = @transform_6, window_bounds = array<i64: 8, 128>}]} {
    %c0_i32 = arith.constant 0 : i32
    %0 = arith.cmpi eq, %arg1, %c0_i32 : i32
    %1 = arith.extui %0 : i1 to i32
    %c0_i32_0 = arith.constant 0 : i32
    %2 = arith.cmpi ne, %1, %c0_i32_0 : i32
    scf.if %2 {
      %cst_81 = arith.constant 0.000000e+00 : f32
      %268 = vector.broadcast %cst_81 : f32 to vector<8x128xf32>
      %c0_82 = arith.constant 0 : index
      %c0_83 = arith.constant 0 : index
      %269 = vector.load %arg9[%c0_82, %c0_83] : memref<8x128xf32, #tpu.memory_space<vmem>>, vector<8x128xf32>
      tpu.vector_store %arg9[%c0_82, %c0_83], %268 {strides = array<i32>} : memref<8x128xf32, #tpu.memory_space<vmem>>, vector<8x128xf32>,
      %cst_84 = arith.constant 0.000000e+00 : f32
      %270 = vector.broadcast %cst_84 : f32 to vector<8x128xf32>
      %c0_85 = arith.constant 0 : index
      %c0_86 = arith.constant 0 : index
      %271 = vector.load %arg10[%c0_85, %c0_86] : memref<8x128xf32, #tpu.memory_space<vmem>>, vector<8x128xf32>
      tpu.vector_store %arg10[%c0_85, %c0_86], %270 {strides = array<i32>} : memref<8x128xf32, #tpu.memory_space<vmem>>, vector<8x128xf32>,
      %cst_87 = arith.constant 0.000000e+00 : f32
      %272 = vector.broadcast %cst_87 : f32 to vector<8x128xf32>
      %c0_88 = arith.constant 0 : index
      %c0_89 = arith.constant 0 : index
      %273 = vector.load %arg11[%c0_88, %c0_89] : memref<8x128xf32, #tpu.memory_space<vmem>>, vector<8x128xf32>
      tpu.vector_store %arg11[%c0_88, %c0_89], %272 {strides = array<i32>} : memref<8x128xf32, #tpu.memory_space<vmem>>, vector<8x128xf32>,
    } else {
    }
    %c0 = arith.constant 0 : index
    %c0_1 = arith.constant 0 : index
    %c0_2 = arith.constant 0 : index
    %c0_3 = arith.constant 0 : index
    %3 = vector.load %arg2[%c0, %c0_1, %c0_2, %c0_3] : memref<1x1x64x128xbf16, #tpu.memory_space<vmem>>, vector<1x1x64x128xbf16>
    %4 = vector.shape_cast %3 : vector<1x1x64x128xbf16> to vector<64x128xbf16>
    %c0_4 = arith.constant 0 : index
    %c0_5 = arith.constant 0 : index
    %5 = vector.load %arg3[%c0_4, %c0_5] : memref<128x512xbf16, #tpu.memory_space<vmem>>, vector<128x512xbf16>
    %cst = arith.constant dense<0.000000e+00> : vector<64x512xf32>
    %6 = tpu.matmul %4, %5, %cst {dimension_numbers = #tpu.dot_dimension_numbers<[1], [0], [0], [1], [0, 0, 1, 1], [], []>} : vector<64x128xbf16>, vector<128x512xbf16>, vector<64x512xf32> -> vector<64x512xf32>
    %c0_6 = arith.constant 0 : index
    %c0_7 = arith.constant 0 : index
    %7 = vector.load %arg5[%c0_6, %c0_7] : memref<1x512xf32, #tpu.memory_space<vmem>>, vector<1x512xf32>
    %8 = vector.broadcast %7 : vector<1x512xf32> to vector<64x512xf32>
    %9 = arith.addf %6, %8 : vector<64x512xf32>
    %c0_8 = arith.constant 0 : index
    %c0_9 = arith.constant 0 : index
    %10 = vector.load %arg12[%c0_8, %c0_9] : memref<64x512xf32, #tpu.memory_space<vmem>>, vector<64x512xf32>
    tpu.vector_store %arg12[%c0_8, %c0_9], %9 {strides = array<i32>} : memref<64x512xf32, #tpu.memory_space<vmem>>, vector<64x512xf32>,
    %c0_10 = arith.constant 0 : index
    %c0_11 = arith.constant 0 : index
    %11 = vector.load %arg9[%c0_10, %c0_11] : memref<8x128xf32, #tpu.memory_space<vmem>>, vector<8x128xf32>
    %c0_12 = arith.constant 0 : index
    %c0_13 = arith.constant 0 : index
    %12 = vector.load %arg10[%c0_12, %c0_13] : memref<8x128xf32, #tpu.memory_space<vmem>>, vector<8x128xf32>
    %c0_14 = arith.constant 0 : index
    %c0_15 = arith.constant 0 : index
    %13 = vector.load %arg11[%c0_14, %c0_15] : memref<8x128xf32, #tpu.memory_space<vmem>>, vector<8x128xf32>
    %c0_16 = arith.constant 0 : index
    %c0_17 = arith.constant 0 : index
    %14 = vector.load %arg12[%c0_16, %c0_17] : memref<64x512xf32, #tpu.memory_space<vmem>>, vector<8x512xf32>
    %15 = arith.truncf %11 : vector<8x128xf32> to vector<8x128xbf16>
    %c0_18 = arith.constant 0 : index
    %c0_19 = arith.constant 0 : index
    %16 = vector.load %arg4[%c0_18, %c0_19] : memref<128x512xbf16, #tpu.memory_space<vmem>>, vector<128x512xbf16>
    %cst_20 = arith.constant dense<0.000000e+00> : vector<8x512xf32>
    %17 = tpu.matmul %15, %16, %cst_20 {dimension_numbers = #tpu.dot_dimension_numbers<[1], [0], [0], [1], [0, 0, 1, 1], [], []>} : vector<8x128xbf16>, vector<128x512xbf16>, vector<8x512xf32> -> vector<8x512xf32>
    %18 = arith.addf %14, %17 : vector<8x512xf32>
    %19 = vector.extract_strided_slice %18 {offsets = [0, 0], sizes = [8, 128], strides = [1, 1]} : vector<8x512xf32> to vector<8x128xf32>
    %20 = arith.negf %19 : vector<8x128xf32>
    %21 = math.exp %20 : vector<8x128xf32>
    %cst_21 = arith.constant 1.000000e+00 : f32
    %22 = vector.broadcast %cst_21 : f32 to vector<8x128xf32>
    %23 = arith.addf %22, %21 : vector<8x128xf32>
    %24 = arith.divf %22, %23 : vector<8x128xf32>
    %25 = vector.extract_strided_slice %18 {offsets = [0, 128], sizes = [8, 128], strides = [1, 1]} : vector<8x512xf32> to vector<8x128xf32>
    %26 = arith.negf %25 : vector<8x128xf32>
    %27 = math.exp %26 : vector<8x128xf32>
    %cst_22 = arith.constant 1.000000e+00 : f32
    %28 = vector.broadcast %cst_22 : f32 to vector<8x128xf32>
    %29 = arith.addf %28, %27 : vector<8x128xf32>
    %30 = arith.divf %28, %29 : vector<8x128xf32>
    %31 = vector.extract_strided_slice %18 {offsets = [0, 256], sizes = [8, 128], strides = [1, 1]} : vector<8x512xf32> to vector<8x128xf32>
    %32 = math.tanh %31 : vector<8x128xf32>
    %33 = vector.extract_strided_slice %18 {offsets = [0, 384], sizes = [8, 128], strides = [1, 1]} : vector<8x512xf32> to vector<8x128xf32>
    %34 = arith.negf %33 : vector<8x128xf32>
    %35 = math.exp %34 : vector<8x128xf32>
    %cst_23 = arith.constant 1.000000e+00 : f32
    %36 = vector.broadcast %cst_23 : f32 to vector<8x128xf32>
    %37 = arith.addf %36, %35 : vector<8x128xf32>
    %38 = arith.divf %36, %37 : vector<8x128xf32>
    %39 = arith.mulf %30, %12 : vector<8x128xf32>
    %40 = arith.mulf %24, %32 : vector<8x128xf32>
    %41 = arith.addf %39, %40 : vector<8x128xf32>
    %42 = math.tanh %41 : vector<8x128xf32>
    %43 = arith.mulf %38, %42 : vector<8x128xf32>
    %44 = arith.addf %13, %43 : vector<8x128xf32>
    %c8 = arith.constant 8 : index
    %c0_24 = arith.constant 0 : index
    %45 = vector.load %arg12[%c8, %c0_24] : memref<64x512xf32, #tpu.memory_space<vmem>>, vector<8x512xf32>
    %46 = arith.truncf %43 : vector<8x128xf32> to vector<8x128xbf16>
    %c0_25 = arith.constant 0 : index
    %c0_26 = arith.constant 0 : index
    %47 = vector.load %arg4[%c0_25, %c0_26] : memref<128x512xbf16, #tpu.memory_space<vmem>>, vector<128x512xbf16>
    %cst_27 = arith.constant dense<0.000000e+00> : vector<8x512xf32>
    %48 = tpu.matmul %46, %47, %cst_27 {dimension_numbers = #tpu.dot_dimension_numbers<[1], [0], [0], [1], [0, 0, 1, 1], [], []>} : vector<8x128xbf16>, vector<128x512xbf16>, vector<8x512xf32> -> vector<8x512xf32>
    %49 = arith.addf %45, %48 : vector<8x512xf32>
    %50 = vector.extract_strided_slice %49 {offsets = [0, 0], sizes = [8, 128], strides = [1, 1]} : vector<8x512xf32> to vector<8x128xf32>
    %51 = arith.negf %50 : vector<8x128xf32>
    %52 = math.exp %51 : vector<8x128xf32>
    %cst_28 = arith.constant 1.000000e+00 : f32
    %53 = vector.broadcast %cst_28 : f32 to vector<8x128xf32>
    %54 = arith.addf %53, %52 : vector<8x128xf32>
    %55 = arith.divf %53, %54 : vector<8x128xf32>
    %56 = vector.extract_strided_slice %49 {offsets = [0, 128], sizes = [8, 128], strides = [1, 1]} : vector<8x512xf32> to vector<8x128xf32>
    %57 = arith.negf %56 : vector<8x128xf32>
    %58 = math.exp %57 : vector<8x128xf32>
    %cst_29 = arith.constant 1.000000e+00 : f32
    %59 = vector.broadcast %cst_29 : f32 to vector<8x128xf32>
    %60 = arith.addf %59, %58 : vector<8x128xf32>
    %61 = arith.divf %59, %60 : vector<8x128xf32>
    %62 = vector.extract_strided_slice %49 {offsets = [0, 256], sizes = [8, 128], strides = [1, 1]} : vector<8x512xf32> to vector<8x128xf32>
    %63 = math.tanh %62 : vector<8x128xf32>
    %64 = vector.extract_strided_slice %49 {offsets = [0, 384], sizes = [8, 128], strides = [1, 1]} : vector<8x512xf32> to vector<8x128xf32>
    %65 = arith.negf %64 : vector<8x128xf32>
    %66 = math.exp %65 : vector<8x128xf32>
    %cst_30 = arith.constant 1.000000e+00 : f32
    %67 = vector.broadcast %cst_30 : f32 to vector<8x128xf32>
    %68 = arith.addf %67, %66 : vector<8x128xf32>
    %69 = arith.divf %67, %68 : vector<8x128xf32>
    %70 = arith.mulf %61, %41 : vector<8x128xf32>
    %71 = arith.mulf %55, %63 : vector<8x128xf32>
    %72 = arith.addf %70, %71 : vector<8x128xf32>
    %73 = math.tanh %72 : vector<8x128xf32>
    %74 = arith.mulf %69, %73 : vector<8x128xf32>
    %75 = arith.addf %44, %74 : vector<8x128xf32>
    %c16 = arith.constant 16 : index
    %c0_31 = arith.constant 0 : index
    %76 = vector.load %arg12[%c16, %c0_31] : memref<64x512xf32, #tpu.memory_space<vmem>>, vector<8x512xf32>
    %77 = arith.truncf %74 : vector<8x128xf32> to vector<8x128xbf16>
    %c0_32 = arith.constant 0 : index
    %c0_33 = arith.constant 0 : index
    %78 = vector.load %arg4[%c0_32, %c0_33] : memref<128x512xbf16, #tpu.memory_space<vmem>>, vector<128x512xbf16>
    %cst_34 = arith.constant dense<0.000000e+00> : vector<8x512xf32>
    %79 = tpu.matmul %77, %78, %cst_34 {dimension_numbers = #tpu.dot_dimension_numbers<[1], [0], [0], [1], [0, 0, 1, 1], [], []>} : vector<8x128xbf16>, vector<128x512xbf16>, vector<8x512xf32> -> vector<8x512xf32>
    %80 = arith.addf %76, %79 : vector<8x512xf32>
    %81 = vector.extract_strided_slice %80 {offsets = [0, 0], sizes = [8, 128], strides = [1, 1]} : vector<8x512xf32> to vector<8x128xf32>
    %82 = arith.negf %81 : vector<8x128xf32>
    %83 = math.exp %82 : vector<8x128xf32>
    %cst_35 = arith.constant 1.000000e+00 : f32
    %84 = vector.broadcast %cst_35 : f32 to vector<8x128xf32>
    %85 = arith.addf %84, %83 : vector<8x128xf32>
    %86 = arith.divf %84, %85 : vector<8x128xf32>
    %87 = vector.extract_strided_slice %80 {offsets = [0, 128], sizes = [8, 128], strides = [1, 1]} : vector<8x512xf32> to vector<8x128xf32>
    %88 = arith.negf %87 : vector<8x128xf32>
    %89 = math.exp %88 : vector<8x128xf32>
    %cst_36 = arith.constant 1.000000e+00 : f32
    %90 = vector.broadcast %cst_36 : f32 to vector<8x128xf32>
    %91 = arith.addf %90, %89 : vector<8x128xf32>
    %92 = arith.divf %90, %91 : vector<8x128xf32>
    %93 = vector.extract_strided_slice %80 {offsets = [0, 256], sizes = [8, 128], strides = [1, 1]} : vector<8x512xf32> to vector<8x128xf32>
    %94 = math.tanh %93 : vector<8x128xf32>
    %95 = vector.extract_strided_slice %80 {offsets = [0, 384], sizes = [8, 128], strides = [1, 1]} : vector<8x512xf32> to vector<8x128xf32>
    %96 = arith.negf %95 : vector<8x128xf32>
    %97 = math.exp %96 : vector<8x128xf32>
    %cst_37 = arith.constant 1.000000e+00 : f32
    %98 = vector.broadcast %cst_37 : f32 to vector<8x128xf32>
    %99 = arith.addf %98, %97 : vector<8x128xf32>
    %100 = arith.divf %98, %99 : vector<8x128xf32>
    %101 = arith.mulf %92, %72 : vector<8x128xf32>
    %102 = arith.mulf %86, %94 : vector<8x128xf32>
    %103 = arith.addf %101, %102 : vector<8x128xf32>
    %104 = math.tanh %103 : vector<8x128xf32>
    %105 = arith.mulf %100, %104 : vector<8x128xf32>
    %106 = arith.addf %75, %105 : vector<8x128xf32>
    %c24 = arith.constant 24 : index
    %c0_38 = arith.constant 0 : index
    %107 = vector.load %arg12[%c24, %c0_38] : memref<64x512xf32, #tpu.memory_space<vmem>>, vector<8x512xf32>
    %108 = arith.truncf %105 : vector<8x128xf32> to vector<8x128xbf16>
    %c0_39 = arith.constant 0 : index
    %c0_40 = arith.constant 0 : index
    %109 = vector.load %arg4[%c0_39, %c0_40] : memref<128x512xbf16, #tpu.memory_space<vmem>>, vector<128x512xbf16>
    %cst_41 = arith.constant dense<0.000000e+00> : vector<8x512xf32>
    %110 = tpu.matmul %108, %109, %cst_41 {dimension_numbers = #tpu.dot_dimension_numbers<[1], [0], [0], [1], [0, 0, 1, 1], [], []>} : vector<8x128xbf16>, vector<128x512xbf16>, vector<8x512xf32> -> vector<8x512xf32>
    %111 = arith.addf %107, %110 : vector<8x512xf32>
    %112 = vector.extract_strided_slice %111 {offsets = [0, 0], sizes = [8, 128], strides = [1, 1]} : vector<8x512xf32> to vector<8x128xf32>
    %113 = arith.negf %112 : vector<8x128xf32>
    %114 = math.exp %113 : vector<8x128xf32>
    %cst_42 = arith.constant 1.000000e+00 : f32
    %115 = vector.broadcast %cst_42 : f32 to vector<8x128xf32>
    %116 = arith.addf %115, %114 : vector<8x128xf32>
    %117 = arith.divf %115, %116 : vector<8x128xf32>
    %118 = vector.extract_strided_slice %111 {offsets = [0, 128], sizes = [8, 128], strides = [1, 1]} : vector<8x512xf32> to vector<8x128xf32>
    %119 = arith.negf %118 : vector<8x128xf32>
    %120 = math.exp %119 : vector<8x128xf32>
    %cst_43 = arith.constant 1.000000e+00 : f32
    %121 = vector.broadcast %cst_43 : f32 to vector<8x128xf32>
    %122 = arith.addf %121, %120 : vector<8x128xf32>
    %123 = arith.divf %121, %122 : vector<8x128xf32>
    %124 = vector.extract_strided_slice %111 {offsets = [0, 256], sizes = [8, 128], strides = [1, 1]} : vector<8x512xf32> to vector<8x128xf32>
    %125 = math.tanh %124 : vector<8x128xf32>
    %126 = vector.extract_strided_slice %111 {offsets = [0, 384], sizes = [8, 128], strides = [1, 1]} : vector<8x512xf32> to vector<8x128xf32>
    %127 = arith.negf %126 : vector<8x128xf32>
    %128 = math.exp %127 : vector<8x128xf32>
    %cst_44 = arith.constant 1.000000e+00 : f32
    %129 = vector.broadcast %cst_44 : f32 to vector<8x128xf32>
    %130 = arith.addf %129, %128 : vector<8x128xf32>
    %131 = arith.divf %129, %130 : vector<8x128xf32>
    %132 = arith.mulf %123, %103 : vector<8x128xf32>
    %133 = arith.mulf %117, %125 : vector<8x128xf32>
    %134 = arith.addf %132, %133 : vector<8x128xf32>
    %135 = math.tanh %134 : vector<8x128xf32>
    %136 = arith.mulf %131, %135 : vector<8x128xf32>
    %137 = arith.addf %106, %136 : vector<8x128xf32>
    %c32 = arith.constant 32 : index
    %c0_45 = arith.constant 0 : index
    %138 = vector.load %arg12[%c32, %c0_45] : memref<64x512xf32, #tpu.memory_space<vmem>>, vector<8x512xf32>
    %139 = arith.truncf %136 : vector<8x128xf32> to vector<8x128xbf16>
    %c0_46 = arith.constant 0 : index
    %c0_47 = arith.constant 0 : index
    %140 = vector.load %arg4[%c0_46, %c0_47] : memref<128x512xbf16, #tpu.memory_space<vmem>>, vector<128x512xbf16>
    %cst_48 = arith.constant dense<0.000000e+00> : vector<8x512xf32>
    %141 = tpu.matmul %139, %140, %cst_48 {dimension_numbers = #tpu.dot_dimension_numbers<[1], [0], [0], [1], [0, 0, 1, 1], [], []>} : vector<8x128xbf16>, vector<128x512xbf16>, vector<8x512xf32> -> vector<8x512xf32>
    %142 = arith.addf %138, %141 : vector<8x512xf32>
    %143 = vector.extract_strided_slice %142 {offsets = [0, 0], sizes = [8, 128], strides = [1, 1]} : vector<8x512xf32> to vector<8x128xf32>
    %144 = arith.negf %143 : vector<8x128xf32>
    %145 = math.exp %144 : vector<8x128xf32>
    %cst_49 = arith.constant 1.000000e+00 : f32
    %146 = vector.broadcast %cst_49 : f32 to vector<8x128xf32>
    %147 = arith.addf %146, %145 : vector<8x128xf32>
    %148 = arith.divf %146, %147 : vector<8x128xf32>
    %149 = vector.extract_strided_slice %142 {offsets = [0, 128], sizes = [8, 128], strides = [1, 1]} : vector<8x512xf32> to vector<8x128xf32>
    %150 = arith.negf %149 : vector<8x128xf32>
    %151 = math.exp %150 : vector<8x128xf32>
    %cst_50 = arith.constant 1.000000e+00 : f32
    %152 = vector.broadcast %cst_50 : f32 to vector<8x128xf32>
    %153 = arith.addf %152, %151 : vector<8x128xf32>
    %154 = arith.divf %152, %153 : vector<8x128xf32>
    %155 = vector.extract_strided_slice %142 {offsets = [0, 256], sizes = [8, 128], strides = [1, 1]} : vector<8x512xf32> to vector<8x128xf32>
    %156 = math.tanh %155 : vector<8x128xf32>
    %157 = vector.extract_strided_slice %142 {offsets = [0, 384], sizes = [8, 128], strides = [1, 1]} : vector<8x512xf32> to vector<8x128xf32>
    %158 = arith.negf %157 : vector<8x128xf32>
    %159 = math.exp %158 : vector<8x128xf32>
    %cst_51 = arith.constant 1.000000e+00 : f32
    %160 = vector.broadcast %cst_51 : f32 to vector<8x128xf32>
    %161 = arith.addf %160, %159 : vector<8x128xf32>
    %162 = arith.divf %160, %161 : vector<8x128xf32>
    %163 = arith.mulf %154, %134 : vector<8x128xf32>
    %164 = arith.mulf %148, %156 : vector<8x128xf32>
    %165 = arith.addf %163, %164 : vector<8x128xf32>
    %166 = math.tanh %165 : vector<8x128xf32>
    %167 = arith.mulf %162, %166 : vector<8x128xf32>
    %168 = arith.addf %137, %167 : vector<8x128xf32>
    %c40 = arith.constant 40 : index
    %c0_52 = arith.constant 0 : index
    %169 = vector.load %arg12[%c40, %c0_52] : memref<64x512xf32, #tpu.memory_space<vmem>>, vector<8x512xf32>
    %170 = arith.truncf %167 : vector<8x128xf32> to vector<8x128xbf16>
    %c0_53 = arith.constant 0 : index
    %c0_54 = arith.constant 0 : index
    %171 = vector.load %arg4[%c0_53, %c0_54] : memref<128x512xbf16, #tpu.memory_space<vmem>>, vector<128x512xbf16>
    %cst_55 = arith.constant dense<0.000000e+00> : vector<8x512xf32>
    %172 = tpu.matmul %170, %171, %cst_55 {dimension_numbers = #tpu.dot_dimension_numbers<[1], [0], [0], [1], [0, 0, 1, 1], [], []>} : vector<8x128xbf16>, vector<128x512xbf16>, vector<8x512xf32> -> vector<8x512xf32>
    %173 = arith.addf %169, %172 : vector<8x512xf32>
    %174 = vector.extract_strided_slice %173 {offsets = [0, 0], sizes = [8, 128], strides = [1, 1]} : vector<8x512xf32> to vector<8x128xf32>
    %175 = arith.negf %174 : vector<8x128xf32>
    %176 = math.exp %175 : vector<8x128xf32>
    %cst_56 = arith.constant 1.000000e+00 : f32
    %177 = vector.broadcast %cst_56 : f32 to vector<8x128xf32>
    %178 = arith.addf %177, %176 : vector<8x128xf32>
    %179 = arith.divf %177, %178 : vector<8x128xf32>
    %180 = vector.extract_strided_slice %173 {offsets = [0, 128], sizes = [8, 128], strides = [1, 1]} : vector<8x512xf32> to vector<8x128xf32>
    %181 = arith.negf %180 : vector<8x128xf32>
    %182 = math.exp %181 : vector<8x128xf32>
    %cst_57 = arith.constant 1.000000e+00 : f32
    %183 = vector.broadcast %cst_57 : f32 to vector<8x128xf32>
    %184 = arith.addf %183, %182 : vector<8x128xf32>
    %185 = arith.divf %183, %184 : vector<8x128xf32>
    %186 = vector.extract_strided_slice %173 {offsets = [0, 256], sizes = [8, 128], strides = [1, 1]} : vector<8x512xf32> to vector<8x128xf32>
    %187 = math.tanh %186 : vector<8x128xf32>
    %188 = vector.extract_strided_slice %173 {offsets = [0, 384], sizes = [8, 128], strides = [1, 1]} : vector<8x512xf32> to vector<8x128xf32>
    %189 = arith.negf %188 : vector<8x128xf32>
    %190 = math.exp %189 : vector<8x128xf32>
    %cst_58 = arith.constant 1.000000e+00 : f32
    %191 = vector.broadcast %cst_58 : f32 to vector<8x128xf32>
    %192 = arith.addf %191, %190 : vector<8x128xf32>
    %193 = arith.divf %191, %192 : vector<8x128xf32>
    %194 = arith.mulf %185, %165 : vector<8x128xf32>
    %195 = arith.mulf %179, %187 : vector<8x128xf32>
    %196 = arith.addf %194, %195 : vector<8x128xf32>
    %197 = math.tanh %196 : vector<8x128xf32>
    %198 = arith.mulf %193, %197 : vector<8x128xf32>
    %199 = arith.addf %168, %198 : vector<8x128xf32>
    %c48 = arith.constant 48 : index
    %c0_59 = arith.constant 0 : index
    %200 = vector.load %arg12[%c48, %c0_59] : memref<64x512xf32, #tpu.memory_space<vmem>>, vector<8x512xf32>
    %201 = arith.truncf %198 : vector<8x128xf32> to vector<8x128xbf16>
    %c0_60 = arith.constant 0 : index
    %c0_61 = arith.constant 0 : index
    %202 = vector.load %arg4[%c0_60, %c0_61] : memref<128x512xbf16, #tpu.memory_space<vmem>>, vector<128x512xbf16>
    %cst_62 = arith.constant dense<0.000000e+00> : vector<8x512xf32>
    %203 = tpu.matmul %201, %202, %cst_62 {dimension_numbers = #tpu.dot_dimension_numbers<[1], [0], [0], [1], [0, 0, 1, 1], [], []>} : vector<8x128xbf16>, vector<128x512xbf16>, vector<8x512xf32> -> vector<8x512xf32>
    %204 = arith.addf %200, %203 : vector<8x512xf32>
    %205 = vector.extract_strided_slice %204 {offsets = [0, 0], sizes = [8, 128], strides = [1, 1]} : vector<8x512xf32> to vector<8x128xf32>
    %206 = arith.negf %205 : vector<8x128xf32>
    %207 = math.exp %206 : vector<8x128xf32>
    %cst_63 = arith.constant 1.000000e+00 : f32
    %208 = vector.broadcast %cst_63 : f32 to vector<8x128xf32>
    %209 = arith.addf %208, %207 : vector<8x128xf32>
    %210 = arith.divf %208, %209 : vector<8x128xf32>
    %211 = vector.extract_strided_slice %204 {offsets = [0, 128], sizes = [8, 128], strides = [1, 1]} : vector<8x512xf32> to vector<8x128xf32>
    %212 = arith.negf %211 : vector<8x128xf32>
    %213 = math.exp %212 : vector<8x128xf32>
    %cst_64 = arith.constant 1.000000e+00 : f32
    %214 = vector.broadcast %cst_64 : f32 to vector<8x128xf32>
    %215 = arith.addf %214, %213 : vector<8x128xf32>
    %216 = arith.divf %214, %215 : vector<8x128xf32>
    %217 = vector.extract_strided_slice %204 {offsets = [0, 256], sizes = [8, 128], strides = [1, 1]} : vector<8x512xf32> to vector<8x128xf32>
    %218 = math.tanh %217 : vector<8x128xf32>
    %219 = vector.extract_strided_slice %204 {offsets = [0, 384], sizes = [8, 128], strides = [1, 1]} : vector<8x512xf32> to vector<8x128xf32>
    %220 = arith.negf %219 : vector<8x128xf32>
    %221 = math.exp %220 : vector<8x128xf32>
    %cst_65 = arith.constant 1.000000e+00 : f32
    %222 = vector.broadcast %cst_65 : f32 to vector<8x128xf32>
    %223 = arith.addf %222, %221 : vector<8x128xf32>
    %224 = arith.divf %222, %223 : vector<8x128xf32>
    %225 = arith.mulf %216, %196 : vector<8x128xf32>
    %226 = arith.mulf %210, %218 : vector<8x128xf32>
    %227 = arith.addf %225, %226 : vector<8x128xf32>
    %228 = math.tanh %227 : vector<8x128xf32>
    %229 = arith.mulf %224, %228 : vector<8x128xf32>
    %230 = arith.addf %199, %229 : vector<8x128xf32>
    %c56 = arith.constant 56 : index
    %c0_66 = arith.constant 0 : index
    %231 = vector.load %arg12[%c56, %c0_66] : memref<64x512xf32, #tpu.memory_space<vmem>>, vector<8x512xf32>
    %232 = arith.truncf %229 : vector<8x128xf32> to vector<8x128xbf16>
    %c0_67 = arith.constant 0 : index
    %c0_68 = arith.constant 0 : index
    %233 = vector.load %arg4[%c0_67, %c0_68] : memref<128x512xbf16, #tpu.memory_space<vmem>>, vector<128x512xbf16>
    %cst_69 = arith.constant dense<0.000000e+00> : vector<8x512xf32>
    %234 = tpu.matmul %232, %233, %cst_69 {dimension_numbers = #tpu.dot_dimension_numbers<[1], [0], [0], [1], [0, 0, 1, 1], [], []>} : vector<8x128xbf16>, vector<128x512xbf16>, vector<8x512xf32> -> vector<8x512xf32>
    %235 = arith.addf %231, %234 : vector<8x512xf32>
    %236 = vector.extract_strided_slice %235 {offsets = [0, 0], sizes = [8, 128], strides = [1, 1]} : vector<8x512xf32> to vector<8x128xf32>
    %237 = arith.negf %236 : vector<8x128xf32>
    %238 = math.exp %237 : vector<8x128xf32>
    %cst_70 = arith.constant 1.000000e+00 : f32
    %239 = vector.broadcast %cst_70 : f32 to vector<8x128xf32>
    %240 = arith.addf %239, %238 : vector<8x128xf32>
    %241 = arith.divf %239, %240 : vector<8x128xf32>
    %242 = vector.extract_strided_slice %235 {offsets = [0, 128], sizes = [8, 128], strides = [1, 1]} : vector<8x512xf32> to vector<8x128xf32>
    %243 = arith.negf %242 : vector<8x128xf32>
    %244 = math.exp %243 : vector<8x128xf32>
    %cst_71 = arith.constant 1.000000e+00 : f32
    %245 = vector.broadcast %cst_71 : f32 to vector<8x128xf32>
    %246 = arith.addf %245, %244 : vector<8x128xf32>
    %247 = arith.divf %245, %246 : vector<8x128xf32>
    %248 = vector.extract_strided_slice %235 {offsets = [0, 256], sizes = [8, 128], strides = [1, 1]} : vector<8x512xf32> to vector<8x128xf32>
    %249 = math.tanh %248 : vector<8x128xf32>
    %250 = vector.extract_strided_slice %235 {offsets = [0, 384], sizes = [8, 128], strides = [1, 1]} : vector<8x512xf32> to vector<8x128xf32>
    %251 = arith.negf %250 : vector<8x128xf32>
    %252 = math.exp %251 : vector<8x128xf32>
    %cst_72 = arith.constant 1.000000e+00 : f32
    %253 = vector.broadcast %cst_72 : f32 to vector<8x128xf32>
    %254 = arith.addf %253, %252 : vector<8x128xf32>
    %255 = arith.divf %253, %254 : vector<8x128xf32>
    %256 = arith.mulf %247, %227 : vector<8x128xf32>
    %257 = arith.mulf %241, %249 : vector<8x128xf32>
    %258 = arith.addf %256, %257 : vector<8x128xf32>
    %259 = math.tanh %258 : vector<8x128xf32>
    %260 = arith.mulf %255, %259 : vector<8x128xf32>
    %261 = arith.addf %230, %260 : vector<8x128xf32>
    %c0_73 = arith.constant 0 : index
    %c0_74 = arith.constant 0 : index
    %262 = vector.load %arg9[%c0_73, %c0_74] : memref<8x128xf32, #tpu.memory_space<vmem>>, vector<8x128xf32>
    tpu.vector_store %arg9[%c0_73, %c0_74], %260 {strides = array<i32>} : memref<8x128xf32, #tpu.memory_space<vmem>>, vector<8x128xf32>,
    %c0_75 = arith.constant 0 : index
    %c0_76 = arith.constant 0 : index
    %263 = vector.load %arg10[%c0_75, %c0_76] : memref<8x128xf32, #tpu.memory_space<vmem>>, vector<8x128xf32>
    tpu.vector_store %arg10[%c0_75, %c0_76], %258 {strides = array<i32>} : memref<8x128xf32, #tpu.memory_space<vmem>>, vector<8x128xf32>,
    %c0_77 = arith.constant 0 : index
    %c0_78 = arith.constant 0 : index
    %264 = vector.load %arg11[%c0_77, %c0_78] : memref<8x128xf32, #tpu.memory_space<vmem>>, vector<8x128xf32>
    tpu.vector_store %arg11[%c0_77, %c0_78], %261 {strides = array<i32>} : memref<8x128xf32, #tpu.memory_space<vmem>>, vector<8x128xf32>,
    %c0_i32_79 = arith.constant 0 : i32
    %265 = arith.cmpi eq, %arg1, %c0_i32_79 : i32
    %266 = arith.extui %265 : i1 to i32
    %c0_i32_80 = arith.constant 0 : i32
    %267 = arith.cmpi ne, %266, %c0_i32_80 : i32
    scf.if %267 {
      %cst_81 = arith.constant 1.250000e-01 : f32
      %268 = vector.broadcast %cst_81 : f32 to vector<8x128xf32>
      %269 = arith.mulf %261, %268 : vector<8x128xf32>
      %c0_82 = arith.constant 0 : index
      %c0_83 = arith.constant 0 : index
      %270 = vector.load %arg6[%c0_82, %c0_83] : memref<128x128xf32, #tpu.memory_space<vmem>>, vector<128x128xf32>
      %cst_84 = arith.constant dense<0.000000e+00> : vector<8x128xf32>
      %271 = tpu.matmul %269, %270, %cst_84 {dimension_numbers = #tpu.dot_dimension_numbers<[1], [0], [0], [1], [0, 0, 1, 1], [], []>} : vector<8x128xf32>, vector<128x128xf32>, vector<8x128xf32> -> vector<8x128xf32>
      %c0_85 = arith.constant 0 : index
      %c0_86 = arith.constant 0 : index
      %272 = vector.load %arg7[%c0_85, %c0_86] : memref<1x128xf32, #tpu.memory_space<vmem>>, vector<1x128xf32>
      %273 = vector.broadcast %272 : vector<1x128xf32> to vector<8x128xf32>
      %274 = arith.addf %271, %273 : vector<8x128xf32>
      %c0_87 = arith.constant 0 : index
      %c0_88 = arith.constant 0 : index
      %275 = vector.load %arg8[%c0_87, %c0_88] : memref<8x128xf32, #tpu.memory_space<vmem>>, vector<8x128xf32>
      tpu.vector_store %arg8[%c0_87, %c0_88], %274 {strides = array<i32>} : memref<8x128xf32, #tpu.memory_space<vmem>>, vector<8x128xf32>,
    } else {
    }
    return
  }
  func.func @transform_0(%arg0: i32, %arg1: i32) -> (i32, i32, i32, i32) {
    %c0_i32 = arith.constant 0 : i32
    %c0_i32_0 = arith.constant 0 : i32
    %c0_i32_1 = arith.constant 0 : i32
    return %arg0, %arg1, %c0_i32, %c0_i32_0 : i32, i32, i32, i32
  }
  func.func @transform_1(%arg0: i32, %arg1: i32) -> (i32, i32) {
    %c0_i32 = arith.constant 0 : i32
    %c0_i32_0 = arith.constant 0 : i32
    %c0_i32_1 = arith.constant 0 : i32
    return %c0_i32, %c0_i32_0 : i32, i32
  }
  func.func @transform_2(%arg0: i32, %arg1: i32) -> (i32, i32) {
    %c0_i32 = arith.constant 0 : i32
    %c0_i32_0 = arith.constant 0 : i32
    %c0_i32_1 = arith.constant 0 : i32
    return %c0_i32, %c0_i32_0 : i32, i32
  }
  func.func @transform_3(%arg0: i32, %arg1: i32) -> (i32, i32) {
    %c0_i32 = arith.constant 0 : i32
    %c0_i32_0 = arith.constant 0 : i32
    %c0_i32_1 = arith.constant 0 : i32
    return %c0_i32, %c0_i32_0 : i32, i32
  }
  func.func @transform_4(%arg0: i32, %arg1: i32) -> (i32, i32) {
    %c0_i32 = arith.constant 0 : i32
    %c0_i32_0 = arith.constant 0 : i32
    %c0_i32_1 = arith.constant 0 : i32
    return %c0_i32, %c0_i32_0 : i32, i32
  }
  func.func @transform_5(%arg0: i32, %arg1: i32) -> (i32, i32) {
    %c0_i32 = arith.constant 0 : i32
    %c0_i32_0 = arith.constant 0 : i32
    %c0_i32_1 = arith.constant 0 : i32
    return %c0_i32, %c0_i32_0 : i32, i32
  }
  func.func @transform_6(%arg0: i32, %arg1: i32) -> (i32, i32) {
    %c0_i32 = arith.constant 0 : i32
    %c0_i32_0 = arith.constant 0 : i32
    return %arg0, %c0_i32 : i32, i32
  }
}

</mosaic_0001>

<llo_original>
// kernel: lstm_net_forward.1
$region0: #{lstm_net_forward.1}
  #allocation0 [shape = 'u32[]', space=smem, size = 0x4, offset = 0x4, fixed_abs, tag = 'smem constant byte address 0x4 - core index']
  #allocation1 [shape = 'u32[144,128]{1,0:T(1,128)}', space=vmem, size = 0x12000, scoped, tag = 'internal scratch']
  #allocation2 [shape = 'f32[8,128]{1,0:T(8,128)}', space=vmem, size = 0x1000, scoped, tag = 'scratch operand']
  #allocation3 [shape = 'f32[8,128]{1,0:T(8,128)}', space=vmem, size = 0x1000, scoped, tag = 'scratch operand']
  #allocation4 [shape = 'f32[8,128]{1,0:T(8,128)}', space=vmem, size = 0x1000, scoped, tag = 'scratch operand']
  #allocation5 [shape = 'f32[64,512]{1,0:T(8,128)}', space=vmem, size = 0x20000, scoped, tag = 'scratch operand']
  %s0 = inlined_call_operand.vmem [shape: bf16[1,1,64,128], index: 0, kind: input, shape index: {}]
  %s1 = inlined_call_operand.vmem [shape: bf16[128,512], index: 1, kind: input, shape index: {}]
  %s2 = inlined_call_operand.hbm [shape: bf16[128,512], index: 2, kind: input, shape index: {}]
  %s3 = inlined_call_operand.vmem [shape: f32[1,512], index: 3, kind: input, shape index: {}]
  %s4 = inlined_call_operand.vmem [shape: f32[128,128], index: 4, kind: input, shape index: {}]
  %s5 = inlined_call_operand.vmem [shape: f32[1,128], index: 5, kind: input, shape index: {}]
  %s6 = inlined_call_operand.vmem [shape: f32[8,128], index: 6, kind: output, shape index: {}]
  %s7 = sld [smem:[#allocation0]]
  $region46: #{lstm_net_forward.1} parent=0
    _
  %s9 = ssub.s32 1, %s7
  %s10 = scalar_select 0, %s9, %s7
  $region1: #{lstm_net_forward.1} parent=0
    #allocation6 [shape = 'u8[131072]{0}', space=vmem, size = 0x20000, scoped, tag = 'input window, operand 2, single buffered']
    #allocation7 [shape = 's32[1]{0}', space=sflag, size = 0x4, scoped, tag = 'scoped memory for lstm_net_forward.1']
    %11 = vsyncpa [#allocation7], 0
    // Predicated region
    $region2: #{lstm_net_forward.1} parent=1 // pred_check
      _
    $region3: #{lstm_net_forward.1} parent=1 // pred_check_branch
      %13 = sbr.rel (0) target = $region5
    $region4: #{lstm_net_forward.1} parent=1 // pred_region
      _
    $region5: #{lstm_net_forward.1} parent=1 // pred_fallthru
      _
    // Predicated region
    $region6: #{lstm_net_forward.1} parent=1 // pred_check
      _
    $region7: #{lstm_net_forward.1} parent=1 // pred_check_branch
      %15 = sbr.rel (0) target = $region9
    $region8: #{lstm_net_forward.1} parent=1 // pred_region
      _
    $region9: #{lstm_net_forward.1} parent=1 // pred_fallthru
      _
    // Predicated region
    $region10: #{lstm_net_forward.1} parent=1 // pred_check
      _
    $region11: #{lstm_net_forward.1} parent=1 // pred_check_branch
      %17 = sbr.rel (0) target = $region13
    $region12: #{lstm_net_forward.1} parent=1 // pred_region
      %s19 = ssub.s32 4096, 4096
      %20 = vsyncadd [#allocation7], %s19
      %s21 = sshll.u32 [#allocation6], 4
      %s22 = int_to_ptr.vmem [resolvable:$true] %s21
      %27 = dma.hbm_to_vmem [thread:$0]  %s2, 4096, %s22, [#allocation7], 256, 256, 16
    $region13: #{lstm_net_forward.1} parent=1 // pred_fallthru
      _
    // Predicated region
    $region14: #{lstm_net_forward.1} parent=1 // pred_check
      _
    $region15: #{lstm_net_forward.1} parent=1 // pred_check_branch
      %29 = sbr.rel (0) target = $region17
    $region16: #{lstm_net_forward.1} parent=1 // pred_region
      _
    $region17: #{lstm_net_forward.1} parent=1 // pred_fallthru
      _
    // Predicated region
    $region18: #{lstm_net_forward.1} parent=1 // pred_check
      _
    $region19: #{lstm_net_forward.1} parent=1 // pred_check_branch
      %31 = sbr.rel (0) target = $region21
    $region20: #{lstm_net_forward.1} parent=1 // pred_region
      _
    $region21: #{lstm_net_forward.1} parent=1 // pred_fallthru
      _
    // Predicated region
    $region22: #{lstm_net_forward.1} parent=1 // pred_check
      _
    $region23: #{lstm_net_forward.1} parent=1 // pred_check_branch
      %33 = sbr.rel (0) target = $region25
    $region24: #{lstm_net_forward.1} parent=1 // pred_region
      _
    $region25: #{lstm_net_forward.1} parent=1 // pred_fallthru
      _
    // Predicated region
    $region26: #{lstm_net_forward.1} parent=1 // pred_check
      _
    $region27: #{lstm_net_forward.1} parent=1 // pred_check_branch
      %35 = sbr.rel (0) target = $region29
    $region28: #{lstm_net_forward.1} parent=1 // pred_region
      %36 = dma.done [#allocation7], 4096
    $region29: #{lstm_net_forward.1} parent=1 // pred_fallthru
      _
    %p38 = scmp.eq.s32.totalorder 0, 0
    // Predicated region
    $region30: #{lstm_net_forward.1} parent=1 // pred_check
      %p39 = pneg %p38
    $region31: #{lstm_net_forward.1} parent=1 // pred_check_branch
      %41 = sbr.rel (%p39) target = $region33
    $region32: #{lstm_net_forward.1} parent=1 // pred_region
      %42 = vst [vmem:[#allocation2] sm:$0xff] 0.0
      %43 = vst [vmem:[#allocation3] sm:$0xff] 0.0
      %44 = vst [vmem:[#allocation4] sm:$0xff] 0.0
    $region33: #{lstm_net_forward.1} parent=1 // pred_fallthru
      _
    %v45 = vld [vmem:[%s0] sm:$0xf]
    %v46 = vld [vmem:[%s0 + $0x4] sm:$0xf]
    %v47 = vld [vmem:[%s0 + $0x8] sm:$0xf]
    %v48 = vld [vmem:[%s0 + $0xc] sm:$0xf]
    %v49 = vld [vmem:[%s0 + $0x10] sm:$0xf]
    %v50 = vld [vmem:[%s0 + $0x14] sm:$0xf]
    %v51 = vld [vmem:[%s0 + $0x18] sm:$0xf]
    %v52 = vld [vmem:[%s0 + $0x1c] sm:$0xf]
    %v53 = vld [vmem:[%s1] sm:$0xff]
    %v54 = vld [vmem:[%s1 + $0x8] sm:$0xff]
    %v55 = vld [vmem:[%s1 + $0x10] sm:$0xff]
    %v56 = vld [vmem:[%s1 + $0x18] sm:$0xff]
    %v57 = vld [vmem:[%s1 + $0x20] sm:$0xff]
    %v58 = vld [vmem:[%s1 + $0x28] sm:$0xff]
    %v59 = vld [vmem:[%s1 + $0x30] sm:$0xff]
    %v60 = vld [vmem:[%s1 + $0x38] sm:$0xff]
    %v61 = vld [vmem:[%s1 + $0x40] sm:$0xff]
    %v62 = vld [vmem:[%s1 + $0x48] sm:$0xff]
    %v63 = vld [vmem:[%s1 + $0x50] sm:$0xff]
    %v64 = vld [vmem:[%s1 + $0x58] sm:$0xff]
    %v65 = vld [vmem:[%s1 + $0x60] sm:$0xff]
    %v66 = vld [vmem:[%s1 + $0x68] sm:$0xff]
    %v67 = vld [vmem:[%s1 + $0x70] sm:$0xff]
    %v68 = vld [vmem:[%s1 + $0x78] sm:$0xff]
    %v69 = vld [vmem:[%s1 + $0x80] sm:$0xff]
    %v70 = vld [vmem:[%s1 + $0x88] sm:$0xff]
    %v71 = vld [vmem:[%s1 + $0x90] sm:$0xff]
    %v72 = vld [vmem:[%s1 + $0x98] sm:$0xff]
    %v73 = vld [vmem:[%s1 + $0xa0] sm:$0xff]
    %v74 = vld [vmem:[%s1 + $0xa8] sm:$0xff]
    %v75 = vld [vmem:[%s1 + $0xb0] sm:$0xff]
    %v76 = vld [vmem:[%s1 + $0xb8] sm:$0xff]
    %v77 = vld [vmem:[%s1 + $0xc0] sm:$0xff]
    %v78 = vld [vmem:[%s1 + $0xc8] sm:$0xff]
    %v79 = vld [vmem:[%s1 + $0xd0] sm:$0xff]
    %v80 = vld [vmem:[%s1 + $0xd8] sm:$0xff]
    %v81 = vld [vmem:[%s1 + $0xe0] sm:$0xff]
    %v82 = vld [vmem:[%s1 + $0xe8] sm:$0xff]
    %v83 = vld [vmem:[%s1 + $0xf0] sm:$0xff]
    %v84 = vld [vmem:[%s1 + $0xf8] sm:$0xff]
    %v85 = vld [vmem:[%s3] sm:$0xf]
    %v87 = vlaneseq
    %v88 = vshrl.u32 %v87, 7
    %v89 = vsub.s32 0, %v88
    %v90 = vrot.slane %v85, %v89
    %v91 = vlaneseq
    %v92 = vshrl.u32 %v91, 7
    %v93 = vsub.s32 1, %v92
    %v94 = vrot.slane %v85, %v93
    %v95 = vlaneseq
    %v96 = vshrl.u32 %v95, 7
    %v97 = vsub.s32 2, %v96
    %v98 = vrot.slane %v85, %v97
    %v99 = vlaneseq
    %v100 = vshrl.u32 %v99, 7
    %v101 = vsub.s32 3, %v100
    %v102 = vrot.slane %v85, %v101
    %v115 = vunpack.c.l.b16 %v45
    %v116 = vunpack.c.l.b16 %v46
    %v117 = vunpack.c.l.b16 %v47
    %v118 = vunpack.c.l.b16 %v48
    %v119 = vunpack.c.l.b16 %v49
    %v120 = vunpack.c.l.b16 %v50
    %v121 = vunpack.c.l.b16 %v51
    %v122 = vunpack.c.l.b16 %v52
    %v123 = vpack.c.b16 %v116, %v115
    %v124 = vpack.c.b16 %v118, %v117
    %v125 = vpack.c.b16 %v120, %v119
    %v126 = vpack.c.b16 %v122, %v121
    %v163 = vunpack.c.l.b16 %v53
    %v164 = vunpack.c.h.b16 %v53
    %v165 = vunpack.c.l.b16 %v54
    %v166 = vunpack.c.h.b16 %v54
    %v167 = vunpack.c.l.b16 %v55
    %v168 = vunpack.c.h.b16 %v55
    %v169 = vunpack.c.l.b16 %v56
    %v170 = vunpack.c.h.b16 %v56
    %v171 = vunpack.c.l.b16 %v57
    %v172 = vunpack.c.h.b16 %v57
    %v173 = vunpack.c.l.b16 %v58
    %v174 = vunpack.c.h.b16 %v58
    %v175 = vunpack.c.l.b16 %v59
    %v176 = vunpack.c.h.b16 %v59
    %v177 = vunpack.c.l.b16 %v60
    %v178 = vunpack.c.h.b16 %v60
    %v179 = vunpack.c.l.b16 %v61
    %v180 = vunpack.c.h.b16 %v61
    %v181 = vunpack.c.l.b16 %v62
    %v182 = vunpack.c.h.b16 %v62
    %v183 = vunpack.c.l.b16 %v63
    %v184 = vunpack.c.h.b16 %v63
    %v185 = vunpack.c.l.b16 %v64
    %v186 = vunpack.c.h.b16 %v64
    %v187 = vunpack.c.l.b16 %v65
    %v188 = vunpack.c.h.b16 %v65
    %v189 = vunpack.c.l.b16 %v66
    %v190 = vunpack.c.h.b16 %v66
    %v191 = vunpack.c.l.b16 %v67
    %v192 = vunpack.c.h.b16 %v67
    %v193 = vunpack.c.l.b16 %v68
    %v194 = vunpack.c.h.b16 %v68
    %v195 = vunpack.c.l.b16 %v69
    %v196 = vunpack.c.h.b16 %v69
    %v197 = vunpack.c.l.b16 %v70
    %v198 = vunpack.c.h.b16 %v70
    %v199 = vunpack.c.l.b16 %v71
    %v200 = vunpack.c.h.b16 %v71
    %v201 = vunpack.c.l.b16 %v72
    %v202 = vunpack.c.h.b16 %v72
    %v203 = vunpack.c.l.b16 %v73
    %v204 = vunpack.c.h.b16 %v73
    %v205 = vunpack.c.l.b16 %v74
    %v206 = vunpack.c.h.b16 %v74
    %v207 = vunpack.c.l.b16 %v75
    %v208 = vunpack.c.h.b16 %v75
    %v209 = vunpack.c.l.b16 %v76
    %v210 = vunpack.c.h.b16 %v76
    %v211 = vunpack.c.l.b16 %v77
    %v212 = vunpack.c.h.b16 %v77
    %v213 = vunpack.c.l.b16 %v78
    %v214 = vunpack.c.h.b16 %v78
    %v215 = vunpack.c.l.b16 %v79
    %v216 = vunpack.c.h.b16 %v79
    %v217 = vunpack.c.l.b16 %v80
    %v218 = vunpack.c.h.b16 %v80
    %v219 = vunpack.c.l.b16 %v81
    %v220 = vunpack.c.h.b16 %v81
    %v221 = vunpack.c.l.b16 %v82
    %v222 = vunpack.c.h.b16 %v82
    %v223 = vunpack.c.l.b16 %v83
    %v224 = vunpack.c.h.b16 %v83
    %v225 = vunpack.c.l.b16 %v84
    %v226 = vunpack.c.h.b16 %v84
    %v227 = vpack.c.b16 %v167, %v163
    %v228 = vpack.c.b16 %v168, %v164
    %v229 = vpack.c.b16 %v169, %v165
    %v230 = vpack.c.b16 %v170, %v166
    %v231 = vpack.c.b16 %v175, %v171
    %v232 = vpack.c.b16 %v176, %v172
    %v233 = vpack.c.b16 %v177, %v173
    %v234 = vpack.c.b16 %v178, %v174
    %v235 = vpack.c.b16 %v183, %v179
    %v236 = vpack.c.b16 %v184, %v180
    %v237 = vpack.c.b16 %v185, %v181
    %v238 = vpack.c.b16 %v186, %v182
    %v239 = vpack.c.b16 %v191, %v187
    %v240 = vpack.c.b16 %v192, %v188
    %v241 = vpack.c.b16 %v193, %v189
    %v242 = vpack.c.b16 %v194, %v190
    %v243 = vpack.c.b16 %v199, %v195
    %v244 = vpack.c.b16 %v200, %v196
    %v245 = vpack.c.b16 %v201, %v197
    %v246 = vpack.c.b16 %v202, %v198
    %v247 = vpack.c.b16 %v207, %v203
    %v248 = vpack.c.b16 %v208, %v204
    %v249 = vpack.c.b16 %v209, %v205
    %v250 = vpack.c.b16 %v210, %v206
    %v251 = vpack.c.b16 %v215, %v211
    %v252 = vpack.c.b16 %v216, %v212
    %v253 = vpack.c.b16 %v217, %v213
    %v254 = vpack.c.b16 %v218, %v214
    %v255 = vpack.c.b16 %v223, %v219
    %v256 = vpack.c.b16 %v224, %v220
    %v257 = vpack.c.b16 %v225, %v221
    %v258 = vpack.c.b16 %v226, %v222
    %291 = vmatprep.subr.bf16.mxu0 %v228
    %292 = vmatpush1.bf16.msra.mxu0 %v227
    %293 = vmatprep.subr.bf16.mxu0 %v232
    %294 = vmatpush1.bf16.msra.mxu0 %v231
    %295 = vmatprep.subr.bf16.mxu0 %v236
    %296 = vmatpush1.bf16.msra.mxu0 %v235
    %297 = vmatprep.subr.bf16.mxu0 %v240
    %298 = vmatpush1.bf16.msra.mxu0 %v239
    %299 = vmatprep.subr.bf16.mxu0 %v244
    %300 = vmatpush1.bf16.msra.mxu0 %v243
    %301 = vmatprep.subr.bf16.mxu0 %v248
    %302 = vmatpush1.bf16.msra.mxu0 %v247
    %303 = vmatprep.subr.bf16.mxu0 %v252
    %304 = vmatpush1.bf16.msra.mxu0 %v251
    %305 = vmatprep.subr.bf16.mxu0 %v256
    %306 = vmatpush1.bf16.msra.mxu0 %v255
    %307 = vmatprep.subr.bf16.mxu0 0
    %308 = vmatpush1.bf16.msra.mxu0 0
    %309 = vmatprep.subr.bf16.mxu0 0
    %310 = vmatpush1.bf16.msra.mxu0 0
    %311 = vmatprep.subr.bf16.mxu0 0
    %312 = vmatpush1.bf16.msra.mxu0 0
    %313 = vmatprep.subr.bf16.mxu0 0
    %314 = vmatpush1.bf16.msra.mxu0 0
    %315 = vmatprep.subr.bf16.mxu0 0
    %316 = vmatpush1.bf16.msra.mxu0 0
    %317 = vmatprep.subr.bf16.mxu0 0
    %318 = vmatpush1.bf16.msra.mxu0 0
    %319 = vmatprep.subr.bf16.mxu0 0
    %320 = vmatpush1.bf16.msra.mxu0 0
    %321 = vmatprep.subr.bf16.mxu0 0
    %322 = vmatpush1.bf16.msra.mxu0 0
    %323 = vmatprep.mubr.bf16.mxu0 0
    %324 = vmatmul.mubr.bf16.gmra.mrb[0].mxu0 %v123
    %v325 = vpop.f32.mrb[0].mxu0
    %v326 = vadd.f32 %v90, %v325
    %v327 = vpop.f32.mrb[0].mxu0
    %v328 = vadd.f32 %v94, %v327
    %v329 = vpop.f32.mrb[0].mxu0
    %v330 = vadd.f32 %v90, %v329
    %v331 = vpop.f32.mrb[0].mxu0
    %v332 = vadd.f32 %v94, %v331
    %333 = vmatprep.mubr.bf16.mxu0 0
    %334 = vmatmul.mubr.bf16.gmra.mrb[0].mxu0 %v124
    %v335 = vpop.f32.mrb[0].mxu0
    %v336 = vadd.f32 %v90, %v335
    %v337 = vpop.f32.mrb[0].mxu0
    %v338 = vadd.f32 %v94, %v337
    %v339 = vpop.f32.mrb[0].mxu0
    %v340 = vadd.f32 %v90, %v339
    %v341 = vpop.f32.mrb[0].mxu0
    %v342 = vadd.f32 %v94, %v341
    %343 = vmatprep.mubr.bf16.mxu0 0
    %344 = vmatmul.mubr.bf16.gmra.mrb[0].mxu0 %v125
    %v345 = vpop.f32.mrb[0].mxu0
    %v346 = vadd.f32 %v90, %v345
    %v347 = vpop.f32.mrb[0].mxu0
    %v348 = vadd.f32 %v94, %v347
    %v349 = vpop.f32.mrb[0].mxu0
    %v350 = vadd.f32 %v90, %v349
    %v351 = vpop.f32.mrb[0].mxu0
    %v352 = vadd.f32 %v94, %v351
    %353 = vmatprep.mubr.bf16.mxu0 0
    %354 = vmatmul.mubr.bf16.gmra.mrb[0].mxu0 %v126
    %v355 = vpop.f32.mrb[0].mxu0
    %v356 = vadd.f32 %v90, %v355
    %v357 = vpop.f32.mrb[0].mxu0
    %v358 = vadd.f32 %v94, %v357
    %v359 = vpop.f32.mrb[0].mxu0
    %v360 = vadd.f32 %v90, %v359
    %v361 = vpop.f32.mrb[0].mxu0
    %v362 = vadd.f32 %v94, %v361
    %363 = vdwg.mxu0
    %364 = vmatprep.subr.bf16.mxu0 %v230
    %365 = vmatpush1.bf16.msra.mxu0 %v229
    %366 = vmatprep.subr.bf16.mxu0 %v234
    %367 = vmatpush1.bf16.msra.mxu0 %v233
    %368 = vmatprep.subr.bf16.mxu0 %v238
    %369 = vmatpush1.bf16.msra.mxu0 %v237
    %370 = vmatprep.subr.bf16.mxu0 %v242
    %371 = vmatpush1.bf16.msra.mxu0 %v241
    %372 = vmatprep.subr.bf16.mxu0 %v246
    %373 = vmatpush1.bf16.msra.mxu0 %v245
    %374 = vmatprep.subr.bf16.mxu0 %v250
    %375 = vmatpush1.bf16.msra.mxu0 %v249
    %376 = vmatprep.subr.bf16.mxu0 %v254
    %377 = vmatpush1.bf16.msra.mxu0 %v253
    %378 = vmatprep.subr.bf16.mxu0 %v258
    %379 = vmatpush1.bf16.msra.mxu0 %v257
    %380 = vmatprep.subr.bf16.mxu0 0
    %381 = vmatpush1.bf16.msra.mxu0 0
    %382 = vmatprep.subr.bf16.mxu0 0
    %383 = vmatpush1.bf16.msra.mxu0 0
    %384 = vmatprep.subr.bf16.mxu0 0
    %385 = vmatpush1.bf16.msra.mxu0 0
    %386 = vmatprep.subr.bf16.mxu0 0
    %387 = vmatpush1.bf16.msra.mxu0 0
    %388 = vmatprep.subr.bf16.mxu0 0
    %389 = vmatpush1.bf16.msra.mxu0 0
    %390 = vmatprep.subr.bf16.mxu0 0
    %391 = vmatpush1.bf16.msra.mxu0 0
    %392 = vmatprep.subr.bf16.mxu0 0
    %393 = vmatpush1.bf16.msra.mxu0 0
    %394 = vmatprep.subr.bf16.mxu0 0
    %395 = vmatpush1.bf16.msra.mxu0 0
    %396 = vmatprep.mubr.bf16.mxu0 0
    %397 = vmatmul.mubr.bf16.gmra.mrb[0].mxu0 %v123
    %v398 = vpop.f32.mrb[0].mxu0
    %v399 = vadd.f32 %v98, %v398
    %v400 = vpop.f32.mrb[0].mxu0
    %v401 = vadd.f32 %v102, %v400
    %v402 = vpop.f32.mrb[0].mxu0
    %v403 = vadd.f32 %v98, %v402
    %v404 = vpop.f32.mrb[0].mxu0
    %v405 = vadd.f32 %v102, %v404
    %406 = vmatprep.mubr.bf16.mxu0 0
    %407 = vmatmul.mubr.bf16.gmra.mrb[0].mxu0 %v124
    %v408 = vpop.f32.mrb[0].mxu0
    %v409 = vadd.f32 %v98, %v408
    %v410 = vpop.f32.mrb[0].mxu0
    %v411 = vadd.f32 %v102, %v410
    %v412 = vpop.f32.mrb[0].mxu0
    %v413 = vadd.f32 %v98, %v412
    %v414 = vpop.f32.mrb[0].mxu0
    %v415 = vadd.f32 %v102, %v414
    %416 = vmatprep.mubr.bf16.mxu0 0
    %417 = vmatmul.mubr.bf16.gmra.mrb[0].mxu0 %v125
    %v418 = vpop.f32.mrb[0].mxu0
    %v419 = vadd.f32 %v98, %v418
    %v420 = vpop.f32.mrb[0].mxu0
    %v421 = vadd.f32 %v102, %v420
    %v422 = vpop.f32.mrb[0].mxu0
    %v423 = vadd.f32 %v98, %v422
    %v424 = vpop.f32.mrb[0].mxu0
    %v425 = vadd.f32 %v102, %v424
    %426 = vmatprep.mubr.bf16.mxu0 0
    %427 = vmatmul.mubr.bf16.gmra.mrb[0].mxu0 %v126
    %v428 = vpop.f32.mrb[0].mxu0
    %v429 = vadd.f32 %v98, %v428
    %v430 = vpop.f32.mrb[0].mxu0
    %v431 = vadd.f32 %v102, %v430
    %v432 = vpop.f32.mrb[0].mxu0
    %v433 = vadd.f32 %v98, %v432
    %v434 = vpop.f32.mrb[0].mxu0
    %v435 = vadd.f32 %v102, %v434
    %436 = vdwg.mxu0
    %437 = vst [vmem:[#allocation5] sm:$0xff] %v326
    %438 = vst [vmem:[#allocation5 + $0x8] sm:$0xff] %v328
    %439 = vst [vmem:[#allocation5 + $0x10] sm:$0xff] %v399
    %440 = vst [vmem:[#allocation5 + $0x18] sm:$0xff] %v401
    %441 = vst [vmem:[#allocation5 + $0x20] sm:$0xff] %v330
    %442 = vst [vmem:[#allocation5 + $0x28] sm:$0xff] %v332
    %443 = vst [vmem:[#allocation5 + $0x30] sm:$0xff] %v403
    %444 = vst [vmem:[#allocation5 + $0x38] sm:$0xff] %v405
    %445 = vst [vmem:[#allocation5 + $0x40] sm:$0xff] %v336
    %446 = vst [vmem:[#allocation5 + $0x48] sm:$0xff] %v338
    %447 = vst [vmem:[#allocation5 + $0x50] sm:$0xff] %v409
    %448 = vst [vmem:[#allocation5 + $0x58] sm:$0xff] %v411
    %449 = vst [vmem:[#allocation5 + $0x60] sm:$0xff] %v340
    %450 = vst [vmem:[#allocation5 + $0x68] sm:$0xff] %v342
    %451 = vst [vmem:[#allocation5 + $0x70] sm:$0xff] %v413
    %452 = vst [vmem:[#allocation5 + $0x78] sm:$0xff] %v415
    %453 = vst [vmem:[#allocation5 + $0x80] sm:$0xff] %v346
    %454 = vst [vmem:[#allocation5 + $0x88] sm:$0xff] %v348
    %455 = vst [vmem:[#allocation5 + $0x90] sm:$0xff] %v419
    %456 = vst [vmem:[#allocation5 + $0x98] sm:$0xff] %v421
    %457 = vst [vmem:[#allocation5 + $0xa0] sm:$0xff] %v350
    %458 = vst [vmem:[#allocation5 + $0xa8] sm:$0xff] %v352
    %459 = vst [vmem:[#allocation5 + $0xb0] sm:$0xff] %v423
    %460 = vst [vmem:[#allocation5 + $0xb8] sm:$0xff] %v425
    %461 = vst [vmem:[#allocation5 + $0xc0] sm:$0xff] %v356
    %462 = vst [vmem:[#allocation5 + $0xc8] sm:$0xff] %v358
    %463 = vst [vmem:[#allocation5 + $0xd0] sm:$0xff] %v429
    %464 = vst [vmem:[#allocation5 + $0xd8] sm:$0xff] %v431
    %465 = vst [vmem:[#allocation5 + $0xe0] sm:$0xff] %v360
    %466 = vst [vmem:[#allocation5 + $0xe8] sm:$0xff] %v362
    %467 = vst [vmem:[#allocation5 + $0xf0] sm:$0xff] %v433
    %468 = vst [vmem:[#allocation5 + $0xf8] sm:$0xff] %v435
    %v469 = vld [vmem:[#allocation2] sm:$0xff]
    %v470 = vld [vmem:[#allocation3] sm:$0xff]
    %v471 = vld [vmem:[#allocation4] sm:$0xff]
    %v472 = vld [vmem:[#allocation5] sm:$0xff]
    %v473 = vld [vmem:[#allocation5 + $0x8] sm:$0xff]
    %v474 = vld [vmem:[#allocation5 + $0x10] sm:$0xff]
    %v475 = vld [vmem:[#allocation5 + $0x18] sm:$0xff]
    %v476 = vpack.c.bf16 %v469, %v469
    %v477 = vld [vmem:[#allocation6] sm:$0xff]
    %v478 = vld [vmem:[#allocation6 + $0x8] sm:$0xff]
    %v479 = vld [vmem:[#allocation6 + $0x10] sm:$0xff]
    %v480 = vld [vmem:[#allocation6 + $0x18] sm:$0xff]
    %v481 = vld [vmem:[#allocation6 + $0x20] sm:$0xff]
    %v482 = vld [vmem:[#allocation6 + $0x28] sm:$0xff]
    %v483 = vld [vmem:[#allocation6 + $0x30] sm:$0xff]
    %v484 = vld [vmem:[#allocation6 + $0x38] sm:$0xff]
    %v485 = vld [vmem:[#allocation6 + $0x40] sm:$0xff]
    %v486 = vld [vmem:[#allocation6 + $0x48] sm:$0xff]
    %v487 = vld [vmem:[#allocation6 + $0x50] sm:$0xff]
    %v488 = vld [vmem:[#allocation6 + $0x58] sm:$0xff]
    %v489 = vld [vmem:[#allocation6 + $0x60] sm:$0xff]
    %v490 = vld [vmem:[#allocation6 + $0x68] sm:$0xff]
    %v491 = vld [vmem:[#allocation6 + $0x70] sm:$0xff]
    %v492 = vld [vmem:[#allocation6 + $0x78] sm:$0xff]
    %v493 = vld [vmem:[#allocation6 + $0x80] sm:$0xff]
    %v494 = vld [vmem:[#allocation6 + $0x88] sm:$0xff]
    %v495 = vld [vmem:[#allocation6 + $0x90] sm:$0xff]
    %v496 = vld [vmem:[#allocation6 + $0x98] sm:$0xff]
    %v497 = vld [vmem:[#allocation6 + $0xa0] sm:$0xff]
    %v498 = vld [vmem:[#allocation6 + $0xa8] sm:$0xff]
    %v499 = vld [vmem:[#allocation6 + $0xb0] sm:$0xff]
    %v500 = vld [vmem:[#allocation6 + $0xb8] sm:$0xff]
    %v501 = vld [vmem:[#allocation6 + $0xc0] sm:$0xff]
    %v502 = vld [vmem:[#allocation6 + $0xc8] sm:$0xff]
    %v503 = vld [vmem:[#allocation6 + $0xd0] sm:$0xff]
    %v504 = vld [vmem:[#allocation6 + $0xd8] sm:$0xff]
    %v505 = vld [vmem:[#allocation6 + $0xe0] sm:$0xff]
    %v506 = vld [vmem:[#allocation6 + $0xe8] sm:$0xff]
    %v507 = vld [vmem:[#allocation6 + $0xf0] sm:$0xff]
    %v508 = vld [vmem:[#allocation6 + $0xf8] sm:$0xff]
    %v541 = vunpack.c.l.b16 %v477
    %v542 = vunpack.c.h.b16 %v477
    %v543 = vunpack.c.l.b16 %v478
    %v544 = vunpack.c.h.b16 %v478
    %v545 = vunpack.c.l.b16 %v479
    %v546 = vunpack.c.h.b16 %v479
    %v547 = vunpack.c.l.b16 %v480
    %v548 = vunpack.c.h.b16 %v480
    %v549 = vunpack.c.l.b16 %v481
    %v550 = vunpack.c.h.b16 %v481
    %v551 = vunpack.c.l.b16 %v482
    %v552 = vunpack.c.h.b16 %v482
    %v553 = vunpack.c.l.b16 %v483
    %v554 = vunpack.c.h.b16 %v483
    %v555 = vunpack.c.l.b16 %v484
    %v556 = vunpack.c.h.b16 %v484
    %v557 = vunpack.c.l.b16 %v485
    %v558 = vunpack.c.h.b16 %v485
    %v559 = vunpack.c.l.b16 %v486
    %v560 = vunpack.c.h.b16 %v486
    %v561 = vunpack.c.l.b16 %v487
    %v562 = vunpack.c.h.b16 %v487
    %v563 = vunpack.c.l.b16 %v488
    %v564 = vunpack.c.h.b16 %v488
    %v565 = vunpack.c.l.b16 %v489
    %v566 = vunpack.c.h.b16 %v489
    %v567 = vunpack.c.l.b16 %v490
    %v568 = vunpack.c.h.b16 %v490
    %v569 = vunpack.c.l.b16 %v491
    %v570 = vunpack.c.h.b16 %v491
    %v571 = vunpack.c.l.b16 %v492
    %v572 = vunpack.c.h.b16 %v492
    %v573 = vunpack.c.l.b16 %v493
    %v574 = vunpack.c.h.b16 %v493
    %v575 = vunpack.c.l.b16 %v494
    %v576 = vunpack.c.h.b16 %v494
    %v577 = vunpack.c.l.b16 %v495
    %v578 = vunpack.c.h.b16 %v495
    %v579 = vunpack.c.l.b16 %v496
    %v580 = vunpack.c.h.b16 %v496
    %v581 = vunpack.c.l.b16 %v497
    %v582 = vunpack.c.h.b16 %v497
    %v583 = vunpack.c.l.b16 %v498
    %v584 = vunpack.c.h.b16 %v498
    %v585 = vunpack.c.l.b16 %v499
    %v586 = vunpack.c.h.b16 %v499
    %v587 = vunpack.c.l.b16 %v500
    %v588 = vunpack.c.h.b16 %v500
    %v589 = vunpack.c.l.b16 %v501
    %v590 = vunpack.c.h.b16 %v501
    %v591 = vunpack.c.l.b16 %v502
    %v592 = vunpack.c.h.b16 %v502
    %v593 = vunpack.c.l.b16 %v503
    %v594 = vunpack.c.h.b16 %v503
    %v595 = vunpack.c.l.b16 %v504
    %v596 = vunpack.c.h.b16 %v504
    %v597 = vunpack.c.l.b16 %v505
    %v598 = vunpack.c.h.b16 %v505
    %v599 = vunpack.c.l.b16 %v506
    %v600 = vunpack.c.h.b16 %v506
    %v601 = vunpack.c.l.b16 %v507
    %v602 = vunpack.c.h.b16 %v507
    %v603 = vunpack.c.l.b16 %v508
    %v604 = vunpack.c.h.b16 %v508
    %v605 = vpack.c.b16 %v545, %v541
    %v606 = vpack.c.b16 %v546, %v542
    %v607 = vpack.c.b16 %v547, %v543
    %v608 = vpack.c.b16 %v548, %v544
    %v609 = vpack.c.b16 %v553, %v549
    %v610 = vpack.c.b16 %v554, %v550
    %v611 = vpack.c.b16 %v555, %v551
    %v612 = vpack.c.b16 %v556, %v552
    %v613 = vpack.c.b16 %v561, %v557
    %v614 = vpack.c.b16 %v562, %v558
    %v615 = vpack.c.b16 %v563, %v559
    %v616 = vpack.c.b16 %v564, %v560
    %v617 = vpack.c.b16 %v569, %v565
    %v618 = vpack.c.b16 %v570, %v566
    %v619 = vpack.c.b16 %v571, %v567
    %v620 = vpack.c.b16 %v572, %v568
    %v621 = vpack.c.b16 %v577, %v573
    %v622 = vpack.c.b16 %v578, %v574
    %v623 = vpack.c.b16 %v579, %v575
    %v624 = vpack.c.b16 %v580, %v576
    %v625 = vpack.c.b16 %v585, %v581
    %v626 = vpack.c.b16 %v586, %v582
    %v627 = vpack.c.b16 %v587, %v583
    %v628 = vpack.c.b16 %v588, %v584
    %v629 = vpack.c.b16 %v593, %v589
    %v630 = vpack.c.b16 %v594, %v590
    %v631 = vpack.c.b16 %v595, %v591
    %v632 = vpack.c.b16 %v596, %v592
    %v633 = vpack.c.b16 %v601, %v597
    %v634 = vpack.c.b16 %v602, %v598
    %v635 = vpack.c.b16 %v603, %v599
    %v636 = vpack.c.b16 %v604, %v600
    %669 = vmatprep.subr.bf16.mxu0 %v606
    %670 = vmatpush1.bf16.msra.mxu0 %v605
    %671 = vmatprep.subr.bf16.mxu0 %v610
    %672 = vmatpush1.bf16.msra.mxu0 %v609
    %673 = vmatprep.subr.bf16.mxu0 %v614
    %674 = vmatpush1.bf16.msra.mxu0 %v613
    %675 = vmatprep.subr.bf16.mxu0 %v618
    %676 = vmatpush1.bf16.msra.mxu0 %v617
    %677 = vmatprep.subr.bf16.mxu0 %v622
    %678 = vmatpush1.bf16.msra.mxu0 %v621
    %679 = vmatprep.subr.bf16.mxu0 %v626
    %680 = vmatpush1.bf16.msra.mxu0 %v625
    %681 = vmatprep.subr.bf16.mxu0 %v630
    %682 = vmatpush1.bf16.msra.mxu0 %v629
    %683 = vmatprep.subr.bf16.mxu0 %v634
    %684 = vmatpush1.bf16.msra.mxu0 %v633
    %685 = vmatprep.subr.bf16.mxu0 0
    %686 = vmatpush1.bf16.msra.mxu0 0
    %687 = vmatprep.subr.bf16.mxu0 0
    %688 = vmatpush1.bf16.msra.mxu0 0
    %689 = vmatprep.subr.bf16.mxu0 0
    %690 = vmatpush1.bf16.msra.mxu0 0
    %691 = vmatprep.subr.bf16.mxu0 0
    %692 = vmatpush1.bf16.msra.mxu0 0
    %693 = vmatprep.subr.bf16.mxu0 0
    %694 = vmatpush1.bf16.msra.mxu0 0
    %695 = vmatprep.subr.bf16.mxu0 0
    %696 = vmatpush1.bf16.msra.mxu0 0
    %697 = vmatprep.subr.bf16.mxu0 0
    %698 = vmatpush1.bf16.msra.mxu0 0
    %699 = vmatprep.subr.bf16.mxu0 0
    %700 = vmatpush1.bf16.msra.mxu0 0
    %701 = vmatprep.mubr.bf16.mxu0 0
    %702 = vmatmul.mubr.bf16.gmra.mrb[0].mxu0 %v476
    %v703 = vpop.f32.mrb[0].mxu0
    %v704 = vadd.f32 0.0, %v703
    %v705 = vpop.f32.mrb[0].mxu0
    %v706 = vadd.f32 0.0, %v705
    %v707 = vpop.f32.mrb[0].mxu0
    %v708 = vpop.f32.mrb[0].mxu0
    %709 = vdwg.mxu0
    %710 = vmatprep.subr.bf16.mxu0 %v608
    %711 = vmatpush1.bf16.msra.mxu0 %v607
    %712 = vmatprep.subr.bf16.mxu0 %v612
    %713 = vmatpush1.bf16.msra.mxu0 %v611
    %714 = vmatprep.subr.bf16.mxu0 %v616
    %715 = vmatpush1.bf16.msra.mxu0 %v615
    %716 = vmatprep.subr.bf16.mxu0 %v620
    %717 = vmatpush1.bf16.msra.mxu0 %v619
    %718 = vmatprep.subr.bf16.mxu0 %v624
    %719 = vmatpush1.bf16.msra.mxu0 %v623
    %720 = vmatprep.subr.bf16.mxu0 %v628
    %721 = vmatpush1.bf16.msra.mxu0 %v627
    %722 = vmatprep.subr.bf16.mxu0 %v632
    %723 = vmatpush1.bf16.msra.mxu0 %v631
    %724 = vmatprep.subr.bf16.mxu0 %v636
    %725 = vmatpush1.bf16.msra.mxu0 %v635
    %726 = vmatprep.subr.bf16.mxu0 0
    %727 = vmatpush1.bf16.msra.mxu0 0
    %728 = vmatprep.subr.bf16.mxu0 0
    %729 = vmatpush1.bf16.msra.mxu0 0
    %730 = vmatprep.subr.bf16.mxu0 0
    %731 = vmatpush1.bf16.msra.mxu0 0
    %732 = vmatprep.subr.bf16.mxu0 0
    %733 = vmatpush1.bf16.msra.mxu0 0
    %734 = vmatprep.subr.bf16.mxu0 0
    %735 = vmatpush1.bf16.msra.mxu0 0
    %736 = vmatprep.subr.bf16.mxu0 0
    %737 = vmatpush1.bf16.msra.mxu0 0
    %738 = vmatprep.subr.bf16.mxu0 0
    %739 = vmatpush1.bf16.msra.mxu0 0
    %740 = vmatprep.subr.bf16.mxu0 0
    %741 = vmatpush1.bf16.msra.mxu0 0
    %742 = vmatprep.mubr.bf16.mxu0 0
    %743 = vmatmul.mubr.bf16.gmra.mrb[0].mxu0 %v476
    %v744 = vpop.f32.mrb[0].mxu0
    %v745 = vadd.f32 0.0, %v744
    %v746 = vpop.f32.mrb[0].mxu0
    %v747 = vadd.f32 0.0, %v746
    %v748 = vpop.f32.mrb[0].mxu0
    %v749 = vpop.f32.mrb[0].mxu0
    %750 = vdwg.mxu0
    %v751 = vadd.f32 %v472, %v704
    %v752 = vadd.f32 %v473, %v706
    %v753 = vadd.f32 %v474, %v745
    %v754 = vadd.f32 %v475, %v747
    %v755 = vxor.u32 %v751, 2147483648
    %v756 = vmul.f32 %v755, 1.442695
    %v757 = vpow.pop %v756
    %v758 = vadd.f32 %v757, 1.0
    %v759 = vrcp.pop %v758
    %v760 = vmul.f32 1.0, %v759
    %v761 = vxor.u32 %v752, 2147483648
    %v762 = vmul.f32 %v761, 1.442695
    %v763 = vpow.pop %v762
    %v764 = vadd.f32 %v763, 1.0
    %v765 = vrcp.pop %v764
    %v766 = vmul.f32 1.0, %v765
    %v767 = vtanh.pop %v753
    %v768 = vxor.u32 %v754, 2147483648
    %v769 = vmul.f32 %v768, 1.442695
    %v770 = vpow.pop %v769
    %v771 = vadd.f32 %v770, 1.0
    %v772 = vrcp.pop %v771
    %v773 = vmul.f32 1.0, %v772
    %v774 = vmul.f32 %v766, %v470
    %v775 = vmul.f32 %v760, %v767
    %v776 = vadd.f32 %v774, %v775
    %v777 = vtanh.pop %v776
    %v778 = vmul.f32 %v773, %v777
    %v779 = vadd.f32 %v471, %v778
    %v780 = vld [vmem:[#allocation5 + $0x20] sm:$0xff]
    %v781 = vld [vmem:[#allocation5 + $0x28] sm:$0xff]
    %v782 = vld [vmem:[#allocation5 + $0x30] sm:$0xff]
    %v783 = vld [vmem:[#allocation5 + $0x38] sm:$0xff]
    %v784 = vpack.c.bf16 %v778, %v778
    %785 = vmatprep.subr.bf16.mxu0 %v606
    %786 = vmatpush1.bf16.msra.mxu0 %v605
    %787 = vmatprep.subr.bf16.mxu0 %v610
    %788 = vmatpush1.bf16.msra.mxu0 %v609
    %789 = vmatprep.subr.bf16.mxu0 %v614
    %790 = vmatpush1.bf16.msra.mxu0 %v613
    %791 = vmatprep.subr.bf16.mxu0 %v618
    %792 = vmatpush1.bf16.msra.mxu0 %v617
    %793 = vmatprep.subr.bf16.mxu0 %v622
    %794 = vmatpush1.bf16.msra.mxu0 %v621
    %795 = vmatprep.subr.bf16.mxu0 %v626
    %796 = vmatpush1.bf16.msra.mxu0 %v625
    %797 = vmatprep.subr.bf16.mxu0 %v630
    %798 = vmatpush1.bf16.msra.mxu0 %v629
    %799 = vmatprep.subr.bf16.mxu0 %v634
    %800 = vmatpush1.bf16.msra.mxu0 %v633
    %801 = vmatprep.subr.bf16.mxu0 0
    %802 = vmatpush1.bf16.msra.mxu0 0
    %803 = vmatprep.subr.bf16.mxu0 0
    %804 = vmatpush1.bf16.msra.mxu0 0
    %805 = vmatprep.subr.bf16.mxu0 0
    %806 = vmatpush1.bf16.msra.mxu0 0
    %807 = vmatprep.subr.bf16.mxu0 0
    %808 = vmatpush1.bf16.msra.mxu0 0
    %809 = vmatprep.subr.bf16.mxu0 0
    %810 = vmatpush1.bf16.msra.mxu0 0
    %811 = vmatprep.subr.bf16.mxu0 0
    %812 = vmatpush1.bf16.msra.mxu0 0
    %813 = vmatprep.subr.bf16.mxu0 0
    %814 = vmatpush1.bf16.msra.mxu0 0
    %815 = vmatprep.subr.bf16.mxu0 0
    %816 = vmatpush1.bf16.msra.mxu0 0
    %817 = vmatprep.mubr.bf16.mxu0 0
    %818 = vmatmul.mubr.bf16.gmra.mrb[0].mxu0 %v784
    %v819 = vpop.f32.mrb[0].mxu0
    %v820 = vadd.f32 0.0, %v819
    %v821 = vpop.f32.mrb[0].mxu0
    %v822 = vadd.f32 0.0, %v821
    %v823 = vpop.f32.mrb[0].mxu0
    %v824 = vpop.f32.mrb[0].mxu0
    %825 = vdwg.mxu0
    %826 = vmatprep.subr.bf16.mxu0 %v608
    %827 = vmatpush1.bf16.msra.mxu0 %v607
    %828 = vmatprep.subr.bf16.mxu0 %v612
    %829 = vmatpush1.bf16.msra.mxu0 %v611
    %830 = vmatprep.subr.bf16.mxu0 %v616
    %831 = vmatpush1.bf16.msra.mxu0 %v615
    %832 = vmatprep.subr.bf16.mxu0 %v620
    %833 = vmatpush1.bf16.msra.mxu0 %v619
    %834 = vmatprep.subr.bf16.mxu0 %v624
    %835 = vmatpush1.bf16.msra.mxu0 %v623
    %836 = vmatprep.subr.bf16.mxu0 %v628
    %837 = vmatpush1.bf16.msra.mxu0 %v627
    %838 = vmatprep.subr.bf16.mxu0 %v632
    %839 = vmatpush1.bf16.msra.mxu0 %v631
    %840 = vmatprep.subr.bf16.mxu0 %v636
    %841 = vmatpush1.bf16.msra.mxu0 %v635
    %842 = vmatprep.subr.bf16.mxu0 0
    %843 = vmatpush1.bf16.msra.mxu0 0
    %844 = vmatprep.subr.bf16.mxu0 0
    %845 = vmatpush1.bf16.msra.mxu0 0
    %846 = vmatprep.subr.bf16.mxu0 0
    %847 = vmatpush1.bf16.msra.mxu0 0
    %848 = vmatprep.subr.bf16.mxu0 0
    %849 = vmatpush1.bf16.msra.mxu0 0
    %850 = vmatprep.subr.bf16.mxu0 0
    %851 = vmatpush1.bf16.msra.mxu0 0
    %852 = vmatprep.subr.bf16.mxu0 0
    %853 = vmatpush1.bf16.msra.mxu0 0
    %854 = vmatprep.subr.bf16.mxu0 0
    %855 = vmatpush1.bf16.msra.mxu0 0
    %856 = vmatprep.subr.bf16.mxu0 0
    %857 = vmatpush1.bf16.msra.mxu0 0
    %858 = vmatprep.mubr.bf16.mxu0 0
    %859 = vmatmul.mubr.bf16.gmra.mrb[0].mxu0 %v784
    %v860 = vpop.f32.mrb[0].mxu0
    %v861 = vadd.f32 0.0, %v860
    %v862 = vpop.f32.mrb[0].mxu0
    %v863 = vadd.f32 0.0, %v862
    %v864 = vpop.f32.mrb[0].mxu0
    %v865 = vpop.f32.mrb[0].mxu0
    %866 = vdwg.mxu0
    %v867 = vadd.f32 %v780, %v820
    %v868 = vadd.f32 %v781, %v822
    %v869 = vadd.f32 %v782, %v861
    %v870 = vadd.f32 %v783, %v863
    %v871 = vxor.u32 %v867, 2147483648
    %v872 = vmul.f32 %v871, 1.442695
    %v873 = vpow.pop %v872
    %v874 = vadd.f32 %v873, 1.0
    %v875 = vrcp.pop %v874
    %v876 = vmul.f32 1.0, %v875
    %v877 = vxor.u32 %v868, 2147483648
    %v878 = vmul.f32 %v877, 1.442695
    %v879 = vpow.pop %v878
    %v880 = vadd.f32 %v879, 1.0
    %v881 = vrcp.pop %v880
    %v882 = vmul.f32 1.0, %v881
    %v883 = vtanh.pop %v869
    %v884 = vxor.u32 %v870, 2147483648
    %v885 = vmul.f32 %v884, 1.442695
    %v886 = vpow.pop %v885
    %v887 = vadd.f32 %v886, 1.0
    %v888 = vrcp.pop %v887
    %v889 = vmul.f32 1.0, %v888
    %v890 = vmul.f32 %v882, %v776
    %v891 = vmul.f32 %v876, %v883
    %v892 = vadd.f32 %v890, %v891
    %v893 = vtanh.pop %v892
    %v894 = vmul.f32 %v889, %v893
    %v895 = vadd.f32 %v779, %v894
    %v896 = vld [vmem:[#allocation5 + $0x40] sm:$0xff]
    %v897 = vld [vmem:[#allocation5 + $0x48] sm:$0xff]
    %v898 = vld [vmem:[#allocation5 + $0x50] sm:$0xff]
    %v899 = vld [vmem:[#allocation5 + $0x58] sm:$0xff]
    %v900 = vpack.c.bf16 %v894, %v894
    %901 = vmatprep.subr.bf16.mxu0 %v606
    %902 = vmatpush1.bf16.msra.mxu0 %v605
    %903 = vmatprep.subr.bf16.mxu0 %v610
    %904 = vmatpush1.bf16.msra.mxu0 %v609
    %905 = vmatprep.subr.bf16.mxu0 %v614
    %906 = vmatpush1.bf16.msra.mxu0 %v613
    %907 = vmatprep.subr.bf16.mxu0 %v618
    %908 = vmatpush1.bf16.msra.mxu0 %v617
    %909 = vmatprep.subr.bf16.mxu0 %v622
    %910 = vmatpush1.bf16.msra.mxu0 %v621
    %911 = vmatprep.subr.bf16.mxu0 %v626
    %912 = vmatpush1.bf16.msra.mxu0 %v625
    %913 = vmatprep.subr.bf16.mxu0 %v630
    %914 = vmatpush1.bf16.msra.mxu0 %v629
    %915 = vmatprep.subr.bf16.mxu0 %v634
    %916 = vmatpush1.bf16.msra.mxu0 %v633
    %917 = vmatprep.subr.bf16.mxu0 0
    %918 = vmatpush1.bf16.msra.mxu0 0
    %919 = vmatprep.subr.bf16.mxu0 0
    %920 = vmatpush1.bf16.msra.mxu0 0
    %921 = vmatprep.subr.bf16.mxu0 0
    %922 = vmatpush1.bf16.msra.mxu0 0
    %923 = vmatprep.subr.bf16.mxu0 0
    %924 = vmatpush1.bf16.msra.mxu0 0
    %925 = vmatprep.subr.bf16.mxu0 0
    %926 = vmatpush1.bf16.msra.mxu0 0
    %927 = vmatprep.subr.bf16.mxu0 0
    %928 = vmatpush1.bf16.msra.mxu0 0
    %929 = vmatprep.subr.bf16.mxu0 0
    %930 = vmatpush1.bf16.msra.mxu0 0
    %931 = vmatprep.subr.bf16.mxu0 0
    %932 = vmatpush1.bf16.msra.mxu0 0
    %933 = vmatprep.mubr.bf16.mxu0 0
    %934 = vmatmul.mubr.bf16.gmra.mrb[0].mxu0 %v900
    %v935 = vpop.f32.mrb[0].mxu0
    %v936 = vadd.f32 0.0, %v935
    %v937 = vpop.f32.mrb[0].mxu0
    %v938 = vadd.f32 0.0, %v937
    %v939 = vpop.f32.mrb[0].mxu0
    %v940 = vpop.f32.mrb[0].mxu0
    %941 = vdwg.mxu0
    %942 = vmatprep.subr.bf16.mxu0 %v608
    %943 = vmatpush1.bf16.msra.mxu0 %v607
    %944 = vmatprep.subr.bf16.mxu0 %v612
    %945 = vmatpush1.bf16.msra.mxu0 %v611
    %946 = vmatprep.subr.bf16.mxu0 %v616
    %947 = vmatpush1.bf16.msra.mxu0 %v615
    %948 = vmatprep.subr.bf16.mxu0 %v620
    %949 = vmatpush1.bf16.msra.mxu0 %v619
    %950 = vmatprep.subr.bf16.mxu0 %v624
    %951 = vmatpush1.bf16.msra.mxu0 %v623
    %952 = vmatprep.subr.bf16.mxu0 %v628
    %953 = vmatpush1.bf16.msra.mxu0 %v627
    %954 = vmatprep.subr.bf16.mxu0 %v632
    %955 = vmatpush1.bf16.msra.mxu0 %v631
    %956 = vmatprep.subr.bf16.mxu0 %v636
    %957 = vmatpush1.bf16.msra.mxu0 %v635
    %958 = vmatprep.subr.bf16.mxu0 0
    %959 = vmatpush1.bf16.msra.mxu0 0
    %960 = vmatprep.subr.bf16.mxu0 0
    %961 = vmatpush1.bf16.msra.mxu0 0
    %962 = vmatprep.subr.bf16.mxu0 0
    %963 = vmatpush1.bf16.msra.mxu0 0
    %964 = vmatprep.subr.bf16.mxu0 0
    %965 = vmatpush1.bf16.msra.mxu0 0
    %966 = vmatprep.subr.bf16.mxu0 0
    %967 = vmatpush1.bf16.msra.mxu0 0
    %968 = vmatprep.subr.bf16.mxu0 0
    %969 = vmatpush1.bf16.msra.mxu0 0
    %970 = vmatprep.subr.bf16.mxu0 0
    %971 = vmatpush1.bf16.msra.mxu0 0
    %972 = vmatprep.subr.bf16.mxu0 0
    %973 = vmatpush1.bf16.msra.mxu0 0
    %974 = vmatprep.mubr.bf16.mxu0 0
    %975 = vmatmul.mubr.bf16.gmra.mrb[0].mxu0 %v900
    %v976 = vpop.f32.mrb[0].mxu0
    %v977 = vadd.f32 0.0, %v976
    %v978 = vpop.f32.mrb[0].mxu0
    %v979 = vadd.f32 0.0, %v978
    %v980 = vpop.f32.mrb[0].mxu0
    %v981 = vpop.f32.mrb[0].mxu0
    %982 = vdwg.mxu0
    %v983 = vadd.f32 %v896, %v936
    %v984 = vadd.f32 %v897, %v938
    %v985 = vadd.f32 %v898, %v977
    %v986 = vadd.f32 %v899, %v979
    %v987 = vxor.u32 %v983, 2147483648
    %v988 = vmul.f32 %v987, 1.442695
    %v989 = vpow.pop %v988
    %v990 = vadd.f32 %v989, 1.0
    %v991 = vrcp.pop %v990
    %v992 = vmul.f32 1.0, %v991
    %v993 = vxor.u32 %v984, 2147483648
    %v994 = vmul.f32 %v993, 1.442695
    %v995 = vpow.pop %v994
    %v996 = vadd.f32 %v995, 1.0
    %v997 = vrcp.pop %v996
    %v998 = vmul.f32 1.0, %v997
    %v999 = vtanh.pop %v985
    %v1000 = vxor.u32 %v986, 2147483648
    %v1001 = vmul.f32 %v1000, 1.442695
    %v1002 = vpow.pop %v1001
    %v1003 = vadd.f32 %v1002, 1.0
    %v1004 = vrcp.pop %v1003
    %v1005 = vmul.f32 1.0, %v1004
    %v1006 = vmul.f32 %v998, %v892
    %v1007 = vmul.f32 %v992, %v999
    %v1008 = vadd.f32 %v1006, %v1007
    %v1009 = vtanh.pop %v1008
    %v1010 = vmul.f32 %v1005, %v1009
    %v1011 = vadd.f32 %v895, %v1010
    %v1012 = vld [vmem:[#allocation5 + $0x60] sm:$0xff]
    %v1013 = vld [vmem:[#allocation5 + $0x68] sm:$0xff]
    %v1014 = vld [vmem:[#allocation5 + $0x70] sm:$0xff]
    %v1015 = vld [vmem:[#allocation5 + $0x78] sm:$0xff]
    %v1016 = vpack.c.bf16 %v1010, %v1010
    %1017 = vmatprep.subr.bf16.mxu0 %v606
    %1018 = vmatpush1.bf16.msra.mxu0 %v605
    %1019 = vmatprep.subr.bf16.mxu0 %v610
    %1020 = vmatpush1.bf16.msra.mxu0 %v609
    %1021 = vmatprep.subr.bf16.mxu0 %v614
    %1022 = vmatpush1.bf16.msra.mxu0 %v613
    %1023 = vmatprep.subr.bf16.mxu0 %v618
    %1024 = vmatpush1.bf16.msra.mxu0 %v617
    %1025 = vmatprep.subr.bf16.mxu0 %v622
    %1026 = vmatpush1.bf16.msra.mxu0 %v621
    %1027 = vmatprep.subr.bf16.mxu0 %v626
    %1028 = vmatpush1.bf16.msra.mxu0 %v625
    %1029 = vmatprep.subr.bf16.mxu0 %v630
    %1030 = vmatpush1.bf16.msra.mxu0 %v629
    %1031 = vmatprep.subr.bf16.mxu0 %v634
    %1032 = vmatpush1.bf16.msra.mxu0 %v633
    %1033 = vmatprep.subr.bf16.mxu0 0
    %1034 = vmatpush1.bf16.msra.mxu0 0
    %1035 = vmatprep.subr.bf16.mxu0 0
    %1036 = vmatpush1.bf16.msra.mxu0 0
    %1037 = vmatprep.subr.bf16.mxu0 0
    %1038 = vmatpush1.bf16.msra.mxu0 0
    %1039 = vmatprep.subr.bf16.mxu0 0
    %1040 = vmatpush1.bf16.msra.mxu0 0
    %1041 = vmatprep.subr.bf16.mxu0 0
    %1042 = vmatpush1.bf16.msra.mxu0 0
    %1043 = vmatprep.subr.bf16.mxu0 0
    %1044 = vmatpush1.bf16.msra.mxu0 0
    %1045 = vmatprep.subr.bf16.mxu0 0
    %1046 = vmatpush1.bf16.msra.mxu0 0
    %1047 = vmatprep.subr.bf16.mxu0 0
    %1048 = vmatpush1.bf16.msra.mxu0 0
    %1049 = vmatprep.mubr.bf16.mxu0 0
    %1050 = vmatmul.mubr.bf16.gmra.mrb[0].mxu0 %v1016
    %v1051 = vpop.f32.mrb[0].mxu0
    %v1052 = vadd.f32 0.0, %v1051
    %v1053 = vpop.f32.mrb[0].mxu0
    %v1054 = vadd.f32 0.0, %v1053
    %v1055 = vpop.f32.mrb[0].mxu0
    %v1056 = vpop.f32.mrb[0].mxu0
    %1057 = vdwg.mxu0
    %1058 = vmatprep.subr.bf16.mxu0 %v608
    %1059 = vmatpush1.bf16.msra.mxu0 %v607
    %1060 = vmatprep.subr.bf16.mxu0 %v612
    %1061 = vmatpush1.bf16.msra.mxu0 %v611
    %1062 = vmatprep.subr.bf16.mxu0 %v616
    %1063 = vmatpush1.bf16.msra.mxu0 %v615
    %1064 = vmatprep.subr.bf16.mxu0 %v620
    %1065 = vmatpush1.bf16.msra.mxu0 %v619
    %1066 = vmatprep.subr.bf16.mxu0 %v624
    %1067 = vmatpush1.bf16.msra.mxu0 %v623
    %1068 = vmatprep.subr.bf16.mxu0 %v628
    %1069 = vmatpush1.bf16.msra.mxu0 %v627
    %1070 = vmatprep.subr.bf16.mxu0 %v632
    %1071 = vmatpush1.bf16.msra.mxu0 %v631
    %1072 = vmatprep.subr.bf16.mxu0 %v636
    %1073 = vmatpush1.bf16.msra.mxu0 %v635
    %1074 = vmatprep.subr.bf16.mxu0 0
    %1075 = vmatpush1.bf16.msra.mxu0 0
    %1076 = vmatprep.subr.bf16.mxu0 0
    %1077 = vmatpush1.bf16.msra.mxu0 0
    %1078 = vmatprep.subr.bf16.mxu0 0
    %1079 = vmatpush1.bf16.msra.mxu0 0
    %1080 = vmatprep.subr.bf16.mxu0 0
    %1081 = vmatpush1.bf16.msra.mxu0 0
    %1082 = vmatprep.subr.bf16.mxu0 0
    %1083 = vmatpush1.bf16.msra.mxu0 0
    %1084 = vmatprep.subr.bf16.mxu0 0
    %1085 = vmatpush1.bf16.msra.mxu0 0
    %1086 = vmatprep.subr.bf16.mxu0 0
    %1087 = vmatpush1.bf16.msra.mxu0 0
    %1088 = vmatprep.subr.bf16.mxu0 0
    %1089 = vmatpush1.bf16.msra.mxu0 0
    %1090 = vmatprep.mubr.bf16.mxu0 0
    %1091 = vmatmul.mubr.bf16.gmra.mrb[0].mxu0 %v1016
    %v1092 = vpop.f32.mrb[0].mxu0
    %v1093 = vadd.f32 0.0, %v1092
    %v1094 = vpop.f32.mrb[0].mxu0
    %v1095 = vadd.f32 0.0, %v1094
    %v1096 = vpop.f32.mrb[0].mxu0
    %v1097 = vpop.f32.mrb[0].mxu0
    %1098 = vdwg.mxu0
    %v1099 = vadd.f32 %v1012, %v1052
    %v1100 = vadd.f32 %v1013, %v1054
    %v1101 = vadd.f32 %v1014, %v1093
    %v1102 = vadd.f32 %v1015, %v1095
    %v1103 = vxor.u32 %v1099, 2147483648
    %v1104 = vmul.f32 %v1103, 1.442695
    %v1105 = vpow.pop %v1104
    %v1106 = vadd.f32 %v1105, 1.0
    %v1107 = vrcp.pop %v1106
    %v1108 = vmul.f32 1.0, %v1107
    %v1109 = vxor.u32 %v1100, 2147483648
    %v1110 = vmul.f32 %v1109, 1.442695
    %v1111 = vpow.pop %v1110
    %v1112 = vadd.f32 %v1111, 1.0
    %v1113 = vrcp.pop %v1112
    %v1114 = vmul.f32 1.0, %v1113
    %v1115 = vtanh.pop %v1101
    %v1116 = vxor.u32 %v1102, 2147483648
    %v1117 = vmul.f32 %v1116, 1.442695
    %v1118 = vpow.pop %v1117
    %v1119 = vadd.f32 %v1118, 1.0
    %v1120 = vrcp.pop %v1119
    %v1121 = vmul.f32 1.0, %v1120
    %v1122 = vmul.f32 %v1114, %v1008
    %v1123 = vmul.f32 %v1108, %v1115
    %v1124 = vadd.f32 %v1122, %v1123
    %v1125 = vtanh.pop %v1124
    %v1126 = vmul.f32 %v1121, %v1125
    %v1127 = vadd.f32 %v1011, %v1126
    %v1128 = vld [vmem:[#allocation5 + $0x80] sm:$0xff]
    %v1129 = vld [vmem:[#allocation5 + $0x88] sm:$0xff]
    %v1130 = vld [vmem:[#allocation5 + $0x90] sm:$0xff]
    %v1131 = vld [vmem:[#allocation5 + $0x98] sm:$0xff]
    %v1132 = vpack.c.bf16 %v1126, %v1126
    %1133 = vmatprep.subr.bf16.mxu0 %v606
    %1134 = vmatpush1.bf16.msra.mxu0 %v605
    %1135 = vmatprep.subr.bf16.mxu0 %v610
    %1136 = vmatpush1.bf16.msra.mxu0 %v609
    %1137 = vmatprep.subr.bf16.mxu0 %v614
    %1138 = vmatpush1.bf16.msra.mxu0 %v613
    %1139 = vmatprep.subr.bf16.mxu0 %v618
    %1140 = vmatpush1.bf16.msra.mxu0 %v617
    %1141 = vmatprep.subr.bf16.mxu0 %v622
    %1142 = vmatpush1.bf16.msra.mxu0 %v621
    %1143 = vmatprep.subr.bf16.mxu0 %v626
    %1144 = vmatpush1.bf16.msra.mxu0 %v625
    %1145 = vmatprep.subr.bf16.mxu0 %v630
    %1146 = vmatpush1.bf16.msra.mxu0 %v629
    %1147 = vmatprep.subr.bf16.mxu0 %v634
    %1148 = vmatpush1.bf16.msra.mxu0 %v633
    %1149 = vmatprep.subr.bf16.mxu0 0
    %1150 = vmatpush1.bf16.msra.mxu0 0
    %1151 = vmatprep.subr.bf16.mxu0 0
    %1152 = vmatpush1.bf16.msra.mxu0 0
    %1153 = vmatprep.subr.bf16.mxu0 0
    %1154 = vmatpush1.bf16.msra.mxu0 0
    %1155 = vmatprep.subr.bf16.mxu0 0
    %1156 = vmatpush1.bf16.msra.mxu0 0
    %1157 = vmatprep.subr.bf16.mxu0 0
    %1158 = vmatpush1.bf16.msra.mxu0 0
    %1159 = vmatprep.subr.bf16.mxu0 0
    %1160 = vmatpush1.bf16.msra.mxu0 0
    %1161 = vmatprep.subr.bf16.mxu0 0
    %1162 = vmatpush1.bf16.msra.mxu0 0
    %1163 = vmatprep.subr.bf16.mxu0 0
    %1164 = vmatpush1.bf16.msra.mxu0 0
    %1165 = vmatprep.mubr.bf16.mxu0 0
    %1166 = vmatmul.mubr.bf16.gmra.mrb[0].mxu0 %v1132
    %v1167 = vpop.f32.mrb[0].mxu0
    %v1168 = vadd.f32 0.0, %v1167
    %v1169 = vpop.f32.mrb[0].mxu0
    %v1170 = vadd.f32 0.0, %v1169
    %v1171 = vpop.f32.mrb[0].mxu0
    %v1172 = vpop.f32.mrb[0].mxu0
    %1173 = vdwg.mxu0
    %1174 = vmatprep.subr.bf16.mxu0 %v608
    %1175 = vmatpush1.bf16.msra.mxu0 %v607
    %1176 = vmatprep.subr.bf16.mxu0 %v612
    %1177 = vmatpush1.bf16.msra.mxu0 %v611
    %1178 = vmatprep.subr.bf16.mxu0 %v616
    %1179 = vmatpush1.bf16.msra.mxu0 %v615
    %1180 = vmatprep.subr.bf16.mxu0 %v620
    %1181 = vmatpush1.bf16.msra.mxu0 %v619
    %1182 = vmatprep.subr.bf16.mxu0 %v624
    %1183 = vmatpush1.bf16.msra.mxu0 %v623
    %1184 = vmatprep.subr.bf16.mxu0 %v628
    %1185 = vmatpush1.bf16.msra.mxu0 %v627
    %1186 = vmatprep.subr.bf16.mxu0 %v632
    %1187 = vmatpush1.bf16.msra.mxu0 %v631
    %1188 = vmatprep.subr.bf16.mxu0 %v636
    %1189 = vmatpush1.bf16.msra.mxu0 %v635
    %1190 = vmatprep.subr.bf16.mxu0 0
    %1191 = vmatpush1.bf16.msra.mxu0 0
    %1192 = vmatprep.subr.bf16.mxu0 0
    %1193 = vmatpush1.bf16.msra.mxu0 0
    %1194 = vmatprep.subr.bf16.mxu0 0
    %1195 = vmatpush1.bf16.msra.mxu0 0
    %1196 = vmatprep.subr.bf16.mxu0 0
    %1197 = vmatpush1.bf16.msra.mxu0 0
    %1198 = vmatprep.subr.bf16.mxu0 0
    %1199 = vmatpush1.bf16.msra.mxu0 0
    %1200 = vmatprep.subr.bf16.mxu0 0
    %1201 = vmatpush1.bf16.msra.mxu0 0
    %1202 = vmatprep.subr.bf16.mxu0 0
    %1203 = vmatpush1.bf16.msra.mxu0 0
    %1204 = vmatprep.subr.bf16.mxu0 0
    %1205 = vmatpush1.bf16.msra.mxu0 0
    %1206 = vmatprep.mubr.bf16.mxu0 0
    %1207 = vmatmul.mubr.bf16.gmra.mrb[0].mxu0 %v1132
    %v1208 = vpop.f32.mrb[0].mxu0
    %v1209 = vadd.f32 0.0, %v1208
    %v1210 = vpop.f32.mrb[0].mxu0
    %v1211 = vadd.f32 0.0, %v1210
    %v1212 = vpop.f32.mrb[0].mxu0
    %v1213 = vpop.f32.mrb[0].mxu0
    %1214 = vdwg.mxu0
    %v1215 = vadd.f32 %v1128, %v1168
    %v1216 = vadd.f32 %v1129, %v1170
    %v1217 = vadd.f32 %v1130, %v1209
    %v1218 = vadd.f32 %v1131, %v1211
    %v1219 = vxor.u32 %v1215, 2147483648
    %v1220 = vmul.f32 %v1219, 1.442695
    %v1221 = vpow.pop %v1220
    %v1222 = vadd.f32 %v1221, 1.0
    %v1223 = vrcp.pop %v1222
    %v1224 = vmul.f32 1.0, %v1223
    %v1225 = vxor.u32 %v1216, 2147483648
    %v1226 = vmul.f32 %v1225, 1.442695
    %v1227 = vpow.pop %v1226
    %v1228 = vadd.f32 %v1227, 1.0
    %v1229 = vrcp.pop %v1228
    %v1230 = vmul.f32 1.0, %v1229
    %v1231 = vtanh.pop %v1217
    %v1232 = vxor.u32 %v1218, 2147483648
    %v1233 = vmul.f32 %v1232, 1.442695
    %v1234 = vpow.pop %v1233
    %v1235 = vadd.f32 %v1234, 1.0
    %v1236 = vrcp.pop %v1235
    %v1237 = vmul.f32 1.0, %v1236
    %v1238 = vmul.f32 %v1230, %v1124
    %v1239 = vmul.f32 %v1224, %v1231
    %v1240 = vadd.f32 %v1238, %v1239
    %v1241 = vtanh.pop %v1240
    %v1242 = vmul.f32 %v1237, %v1241
    %v1243 = vadd.f32 %v1127, %v1242
    %v1244 = vld [vmem:[#allocation5 + $0xa0] sm:$0xff]
    %v1245 = vld [vmem:[#allocation5 + $0xa8] sm:$0xff]
    %v1246 = vld [vmem:[#allocation5 + $0xb0] sm:$0xff]
    %v1247 = vld [vmem:[#allocation5 + $0xb8] sm:$0xff]
    %v1248 = vpack.c.bf16 %v1242, %v1242
    %1249 = vmatprep.subr.bf16.mxu0 %v606
    %1250 = vmatpush1.bf16.msra.mxu0 %v605
    %1251 = vmatprep.subr.bf16.mxu0 %v610
    %1252 = vmatpush1.bf16.msra.mxu0 %v609
    %1253 = vmatprep.subr.bf16.mxu0 %v614
    %1254 = vmatpush1.bf16.msra.mxu0 %v613
    %1255 = vmatprep.subr.bf16.mxu0 %v618
    %1256 = vmatpush1.bf16.msra.mxu0 %v617
    %1257 = vmatprep.subr.bf16.mxu0 %v622
    %1258 = vmatpush1.bf16.msra.mxu0 %v621
    %1259 = vmatprep.subr.bf16.mxu0 %v626
    %1260 = vmatpush1.bf16.msra.mxu0 %v625
    %1261 = vmatprep.subr.bf16.mxu0 %v630
    %1262 = vmatpush1.bf16.msra.mxu0 %v629
    %1263 = vmatprep.subr.bf16.mxu0 %v634
    %1264 = vmatpush1.bf16.msra.mxu0 %v633
    %1265 = vmatprep.subr.bf16.mxu0 0
    %1266 = vmatpush1.bf16.msra.mxu0 0
    %1267 = vmatprep.subr.bf16.mxu0 0
    %1268 = vmatpush1.bf16.msra.mxu0 0
    %1269 = vmatprep.subr.bf16.mxu0 0
    %1270 = vmatpush1.bf16.msra.mxu0 0
    %1271 = vmatprep.subr.bf16.mxu0 0
    %1272 = vmatpush1.bf16.msra.mxu0 0
    %1273 = vmatprep.subr.bf16.mxu0 0
    %1274 = vmatpush1.bf16.msra.mxu0 0
    %1275 = vmatprep.subr.bf16.mxu0 0
    %1276 = vmatpush1.bf16.msra.mxu0 0
    %1277 = vmatprep.subr.bf16.mxu0 0
    %1278 = vmatpush1.bf16.msra.mxu0 0
    %1279 = vmatprep.subr.bf16.mxu0 0
    %1280 = vmatpush1.bf16.msra.mxu0 0
    %1281 = vmatprep.mubr.bf16.mxu0 0
    %1282 = vmatmul.mubr.bf16.gmra.mrb[0].mxu0 %v1248
    %v1283 = vpop.f32.mrb[0].mxu0
    %v1284 = vadd.f32 0.0, %v1283
    %v1285 = vpop.f32.mrb[0].mxu0
    %v1286 = vadd.f32 0.0, %v1285
    %v1287 = vpop.f32.mrb[0].mxu0
    %v1288 = vpop.f32.mrb[0].mxu0
    %1289 = vdwg.mxu0
    %1290 = vmatprep.subr.bf16.mxu0 %v608
    %1291 = vmatpush1.bf16.msra.mxu0 %v607
    %1292 = vmatprep.subr.bf16.mxu0 %v612
    %1293 = vmatpush1.bf16.msra.mxu0 %v611
    %1294 = vmatprep.subr.bf16.mxu0 %v616
    %1295 = vmatpush1.bf16.msra.mxu0 %v615
    %1296 = vmatprep.subr.bf16.mxu0 %v620
    %1297 = vmatpush1.bf16.msra.mxu0 %v619
    %1298 = vmatprep.subr.bf16.mxu0 %v624
    %1299 = vmatpush1.bf16.msra.mxu0 %v623
    %1300 = vmatprep.subr.bf16.mxu0 %v628
    %1301 = vmatpush1.bf16.msra.mxu0 %v627
    %1302 = vmatprep.subr.bf16.mxu0 %v632
    %1303 = vmatpush1.bf16.msra.mxu0 %v631
    %1304 = vmatprep.subr.bf16.mxu0 %v636
    %1305 = vmatpush1.bf16.msra.mxu0 %v635
    %1306 = vmatprep.subr.bf16.mxu0 0
    %1307 = vmatpush1.bf16.msra.mxu0 0
    %1308 = vmatprep.subr.bf16.mxu0 0
    %1309 = vmatpush1.bf16.msra.mxu0 0
    %1310 = vmatprep.subr.bf16.mxu0 0
    %1311 = vmatpush1.bf16.msra.mxu0 0
    %1312 = vmatprep.subr.bf16.mxu0 0
    %1313 = vmatpush1.bf16.msra.mxu0 0
    %1314 = vmatprep.subr.bf16.mxu0 0
    %1315 = vmatpush1.bf16.msra.mxu0 0
    %1316 = vmatprep.subr.bf16.mxu0 0
    %1317 = vmatpush1.bf16.msra.mxu0 0
    %1318 = vmatprep.subr.bf16.mxu0 0
    %1319 = vmatpush1.bf16.msra.mxu0 0
    %1320 = vmatprep.subr.bf16.mxu0 0
    %1321 = vmatpush1.bf16.msra.mxu0 0
    %1322 = vmatprep.mubr.bf16.mxu0 0
    %1323 = vmatmul.mubr.bf16.gmra.mrb[0].mxu0 %v1248
    %v1324 = vpop.f32.mrb[0].mxu0
    %v1325 = vadd.f32 0.0, %v1324
    %v1326 = vpop.f32.mrb[0].mxu0
    %v1327 = vadd.f32 0.0, %v1326
    %v1328 = vpop.f32.mrb[0].mxu0
    %v1329 = vpop.f32.mrb[0].mxu0
    %1330 = vdwg.mxu0
    %v1331 = vadd.f32 %v1244, %v1284
    %v1332 = vadd.f32 %v1245, %v1286
    %v1333 = vadd.f32 %v1246, %v1325
    %v1334 = vadd.f32 %v1247, %v1327
    %v1335 = vxor.u32 %v1331, 2147483648
    %v1336 = vmul.f32 %v1335, 1.442695
    %v1337 = vpow.pop %v1336
    %v1338 = vadd.f32 %v1337, 1.0
    %v1339 = vrcp.pop %v1338
    %v1340 = vmul.f32 1.0, %v1339
    %v1341 = vxor.u32 %v1332, 2147483648
    %v1342 = vmul.f32 %v1341, 1.442695
    %v1343 = vpow.pop %v1342
    %v1344 = vadd.f32 %v1343, 1.0
    %v1345 = vrcp.pop %v1344
    %v1346 = vmul.f32 1.0, %v1345
    %v1347 = vtanh.pop %v1333
    %v1348 = vxor.u32 %v1334, 2147483648
    %v1349 = vmul.f32 %v1348, 1.442695
    %v1350 = vpow.pop %v1349
    %v1351 = vadd.f32 %v1350, 1.0
    %v1352 = vrcp.pop %v1351
    %v1353 = vmul.f32 1.0, %v1352
    %v1354 = vmul.f32 %v1346, %v1240
    %v1355 = vmul.f32 %v1340, %v1347
    %v1356 = vadd.f32 %v1354, %v1355
    %v1357 = vtanh.pop %v1356
    %v1358 = vmul.f32 %v1353, %v1357
    %v1359 = vadd.f32 %v1243, %v1358
    %v1360 = vld [vmem:[#allocation5 + $0xc0] sm:$0xff]
    %v1361 = vld [vmem:[#allocation5 + $0xc8] sm:$0xff]
    %v1362 = vld [vmem:[#allocation5 + $0xd0] sm:$0xff]
    %v1363 = vld [vmem:[#allocation5 + $0xd8] sm:$0xff]
    %v1364 = vpack.c.bf16 %v1358, %v1358
    %1365 = vmatprep.subr.bf16.mxu0 %v606
    %1366 = vmatpush1.bf16.msra.mxu0 %v605
    %1367 = vmatprep.subr.bf16.mxu0 %v610
    %1368 = vmatpush1.bf16.msra.mxu0 %v609
    %1369 = vmatprep.subr.bf16.mxu0 %v614
    %1370 = vmatpush1.bf16.msra.mxu0 %v613
    %1371 = vmatprep.subr.bf16.mxu0 %v618
    %1372 = vmatpush1.bf16.msra.mxu0 %v617
    %1373 = vmatprep.subr.bf16.mxu0 %v622
    %1374 = vmatpush1.bf16.msra.mxu0 %v621
    %1375 = vmatprep.subr.bf16.mxu0 %v626
    %1376 = vmatpush1.bf16.msra.mxu0 %v625
    %1377 = vmatprep.subr.bf16.mxu0 %v630
    %1378 = vmatpush1.bf16.msra.mxu0 %v629
    %1379 = vmatprep.subr.bf16.mxu0 %v634
    %1380 = vmatpush1.bf16.msra.mxu0 %v633
    %1381 = vmatprep.subr.bf16.mxu0 0
    %1382 = vmatpush1.bf16.msra.mxu0 0
    %1383 = vmatprep.subr.bf16.mxu0 0
    %1384 = vmatpush1.bf16.msra.mxu0 0
    %1385 = vmatprep.subr.bf16.mxu0 0
    %1386 = vmatpush1.bf16.msra.mxu0 0
    %1387 = vmatprep.subr.bf16.mxu0 0
    %1388 = vmatpush1.bf16.msra.mxu0 0
    %1389 = vmatprep.subr.bf16.mxu0 0
    %1390 = vmatpush1.bf16.msra.mxu0 0
    %1391 = vmatprep.subr.bf16.mxu0 0
    %1392 = vmatpush1.bf16.msra.mxu0 0
    %1393 = vmatprep.subr.bf16.mxu0 0
    %1394 = vmatpush1.bf16.msra.mxu0 0
    %1395 = vmatprep.subr.bf16.mxu0 0
    %1396 = vmatpush1.bf16.msra.mxu0 0
    %1397 = vmatprep.mubr.bf16.mxu0 0
    %1398 = vmatmul.mubr.bf16.gmra.mrb[0].mxu0 %v1364
    %v1399 = vpop.f32.mrb[0].mxu0
    %v1400 = vadd.f32 0.0, %v1399
    %v1401 = vpop.f32.mrb[0].mxu0
    %v1402 = vadd.f32 0.0, %v1401
    %v1403 = vpop.f32.mrb[0].mxu0
    %v1404 = vpop.f32.mrb[0].mxu0
    %1405 = vdwg.mxu0
    %1406 = vmatprep.subr.bf16.mxu0 %v608
    %1407 = vmatpush1.bf16.msra.mxu0 %v607
    %1408 = vmatprep.subr.bf16.mxu0 %v612
    %1409 = vmatpush1.bf16.msra.mxu0 %v611
    %1410 = vmatprep.subr.bf16.mxu0 %v616
    %1411 = vmatpush1.bf16.msra.mxu0 %v615
    %1412 = vmatprep.subr.bf16.mxu0 %v620
    %1413 = vmatpush1.bf16.msra.mxu0 %v619
    %1414 = vmatprep.subr.bf16.mxu0 %v624
    %1415 = vmatpush1.bf16.msra.mxu0 %v623
    %1416 = vmatprep.subr.bf16.mxu0 %v628
    %1417 = vmatpush1.bf16.msra.mxu0 %v627
    %1418 = vmatprep.subr.bf16.mxu0 %v632
    %1419 = vmatpush1.bf16.msra.mxu0 %v631
    %1420 = vmatprep.subr.bf16.mxu0 %v636
    %1421 = vmatpush1.bf16.msra.mxu0 %v635
    %1422 = vmatprep.subr.bf16.mxu0 0
    %1423 = vmatpush1.bf16.msra.mxu0 0
    %1424 = vmatprep.subr.bf16.mxu0 0
    %1425 = vmatpush1.bf16.msra.mxu0 0
    %1426 = vmatprep.subr.bf16.mxu0 0
    %1427 = vmatpush1.bf16.msra.mxu0 0
    %1428 = vmatprep.subr.bf16.mxu0 0
    %1429 = vmatpush1.bf16.msra.mxu0 0
    %1430 = vmatprep.subr.bf16.mxu0 0
    %1431 = vmatpush1.bf16.msra.mxu0 0
    %1432 = vmatprep.subr.bf16.mxu0 0
    %1433 = vmatpush1.bf16.msra.mxu0 0
    %1434 = vmatprep.subr.bf16.mxu0 0
    %1435 = vmatpush1.bf16.msra.mxu0 0
    %1436 = vmatprep.subr.bf16.mxu0 0
    %1437 = vmatpush1.bf16.msra.mxu0 0
    %1438 = vmatprep.mubr.bf16.mxu0 0
    %1439 = vmatmul.mubr.bf16.gmra.mrb[0].mxu0 %v1364
    %v1440 = vpop.f32.mrb[0].mxu0
    %v1441 = vadd.f32 0.0, %v1440
    %v1442 = vpop.f32.mrb[0].mxu0
    %v1443 = vadd.f32 0.0, %v1442
    %v1444 = vpop.f32.mrb[0].mxu0
    %v1445 = vpop.f32.mrb[0].mxu0
    %1446 = vdwg.mxu0
    %v1447 = vadd.f32 %v1360, %v1400
    %v1448 = vadd.f32 %v1361, %v1402
    %v1449 = vadd.f32 %v1362, %v1441
    %v1450 = vadd.f32 %v1363, %v1443
    %v1451 = vxor.u32 %v1447, 2147483648
    %v1452 = vmul.f32 %v1451, 1.442695
    %v1453 = vpow.pop %v1452
    %v1454 = vadd.f32 %v1453, 1.0
    %v1455 = vrcp.pop %v1454
    %v1456 = vmul.f32 1.0, %v1455
    %v1457 = vxor.u32 %v1448, 2147483648
    %v1458 = vmul.f32 %v1457, 1.442695
    %v1459 = vpow.pop %v1458
    %v1460 = vadd.f32 %v1459, 1.0
    %v1461 = vrcp.pop %v1460
    %v1462 = vmul.f32 1.0, %v1461
    %v1463 = vtanh.pop %v1449
    %v1464 = vxor.u32 %v1450, 2147483648
    %v1465 = vmul.f32 %v1464, 1.442695
    %v1466 = vpow.pop %v1465
    %v1467 = vadd.f32 %v1466, 1.0
    %v1468 = vrcp.pop %v1467
    %v1469 = vmul.f32 1.0, %v1468
    %v1470 = vmul.f32 %v1462, %v1356
    %v1471 = vmul.f32 %v1456, %v1463
    %v1472 = vadd.f32 %v1470, %v1471
    %v1473 = vtanh.pop %v1472
    %v1474 = vmul.f32 %v1469, %v1473
    %v1475 = vadd.f32 %v1359, %v1474
    %v1476 = vld [vmem:[#allocation5 + $0xe0] sm:$0xff]
    %v1477 = vld [vmem:[#allocation5 + $0xe8] sm:$0xff]
    %v1478 = vld [vmem:[#allocation5 + $0xf0] sm:$0xff]
    %v1479 = vld [vmem:[#allocation5 + $0xf8] sm:$0xff]
    %v1480 = vpack.c.bf16 %v1474, %v1474
    %1481 = vmatprep.subr.bf16.mxu0 %v606
    %1482 = vmatpush1.bf16.msra.mxu0 %v605
    %1483 = vmatprep.subr.bf16.mxu0 %v610
    %1484 = vmatpush1.bf16.msra.mxu0 %v609
    %1485 = vmatprep.subr.bf16.mxu0 %v614
    %1486 = vmatpush1.bf16.msra.mxu0 %v613
    %1487 = vmatprep.subr.bf16.mxu0 %v618
    %1488 = vmatpush1.bf16.msra.mxu0 %v617
    %1489 = vmatprep.subr.bf16.mxu0 %v622
    %1490 = vmatpush1.bf16.msra.mxu0 %v621
    %1491 = vmatprep.subr.bf16.mxu0 %v626
    %1492 = vmatpush1.bf16.msra.mxu0 %v625
    %1493 = vmatprep.subr.bf16.mxu0 %v630
    %1494 = vmatpush1.bf16.msra.mxu0 %v629
    %1495 = vmatprep.subr.bf16.mxu0 %v634
    %1496 = vmatpush1.bf16.msra.mxu0 %v633
    %1497 = vmatprep.subr.bf16.mxu0 0
    %1498 = vmatpush1.bf16.msra.mxu0 0
    %1499 = vmatprep.subr.bf16.mxu0 0
    %1500 = vmatpush1.bf16.msra.mxu0 0
    %1501 = vmatprep.subr.bf16.mxu0 0
    %1502 = vmatpush1.bf16.msra.mxu0 0
    %1503 = vmatprep.subr.bf16.mxu0 0
    %1504 = vmatpush1.bf16.msra.mxu0 0
    %1505 = vmatprep.subr.bf16.mxu0 0
    %1506 = vmatpush1.bf16.msra.mxu0 0
    %1507 = vmatprep.subr.bf16.mxu0 0
    %1508 = vmatpush1.bf16.msra.mxu0 0
    %1509 = vmatprep.subr.bf16.mxu0 0
    %1510 = vmatpush1.bf16.msra.mxu0 0
    %1511 = vmatprep.subr.bf16.mxu0 0
    %1512 = vmatpush1.bf16.msra.mxu0 0
    %1513 = vmatprep.mubr.bf16.mxu0 0
    %1514 = vmatmul.mubr.bf16.gmra.mrb[0].mxu0 %v1480
    %v1515 = vpop.f32.mrb[0].mxu0
    %v1516 = vadd.f32 0.0, %v1515
    %v1517 = vpop.f32.mrb[0].mxu0
    %v1518 = vadd.f32 0.0, %v1517
    %v1519 = vpop.f32.mrb[0].mxu0
    %v1520 = vpop.f32.mrb[0].mxu0
    %1521 = vdwg.mxu0
    %1522 = vmatprep.subr.bf16.mxu0 %v608
    %1523 = vmatpush1.bf16.msra.mxu0 %v607
    %1524 = vmatprep.subr.bf16.mxu0 %v612
    %1525 = vmatpush1.bf16.msra.mxu0 %v611
    %1526 = vmatprep.subr.bf16.mxu0 %v616
    %1527 = vmatpush1.bf16.msra.mxu0 %v615
    %1528 = vmatprep.subr.bf16.mxu0 %v620
    %1529 = vmatpush1.bf16.msra.mxu0 %v619
    %1530 = vmatprep.subr.bf16.mxu0 %v624
    %1531 = vmatpush1.bf16.msra.mxu0 %v623
    %1532 = vmatprep.subr.bf16.mxu0 %v628
    %1533 = vmatpush1.bf16.msra.mxu0 %v627
    %1534 = vmatprep.subr.bf16.mxu0 %v632
    %1535 = vmatpush1.bf16.msra.mxu0 %v631
    %1536 = vmatprep.subr.bf16.mxu0 %v636
    %1537 = vmatpush1.bf16.msra.mxu0 %v635
    %1538 = vmatprep.subr.bf16.mxu0 0
    %1539 = vmatpush1.bf16.msra.mxu0 0
    %1540 = vmatprep.subr.bf16.mxu0 0
    %1541 = vmatpush1.bf16.msra.mxu0 0
    %1542 = vmatprep.subr.bf16.mxu0 0
    %1543 = vmatpush1.bf16.msra.mxu0 0
    %1544 = vmatprep.subr.bf16.mxu0 0
    %1545 = vmatpush1.bf16.msra.mxu0 0
    %1546 = vmatprep.subr.bf16.mxu0 0
    %1547 = vmatpush1.bf16.msra.mxu0 0
    %1548 = vmatprep.subr.bf16.mxu0 0
    %1549 = vmatpush1.bf16.msra.mxu0 0
    %1550 = vmatprep.subr.bf16.mxu0 0
    %1551 = vmatpush1.bf16.msra.mxu0 0
    %1552 = vmatprep.subr.bf16.mxu0 0
    %1553 = vmatpush1.bf16.msra.mxu0 0
    %1554 = vmatprep.mubr.bf16.mxu0 0
    %1555 = vmatmul.mubr.bf16.gmra.mrb[0].mxu0 %v1480
    %v1556 = vpop.f32.mrb[0].mxu0
    %v1557 = vadd.f32 0.0, %v1556
    %v1558 = vpop.f32.mrb[0].mxu0
    %v1559 = vadd.f32 0.0, %v1558
    %v1560 = vpop.f32.mrb[0].mxu0
    %v1561 = vpop.f32.mrb[0].mxu0
    %1562 = vdwg.mxu0
    %v1563 = vadd.f32 %v1476, %v1516
    %v1564 = vadd.f32 %v1477, %v1518
    %v1565 = vadd.f32 %v1478, %v1557
    %v1566 = vadd.f32 %v1479, %v1559
    %v1567 = vxor.u32 %v1563, 2147483648
    %v1568 = vmul.f32 %v1567, 1.442695
    %v1569 = vpow.pop %v1568
    %v1570 = vadd.f32 %v1569, 1.0
    %v1571 = vrcp.pop %v1570
    %v1572 = vmul.f32 1.0, %v1571
    %v1573 = vxor.u32 %v1564, 2147483648
    %v1574 = vmul.f32 %v1573, 1.442695
    %v1575 = vpow.pop %v1574
    %v1576 = vadd.f32 %v1575, 1.0
    %v1577 = vrcp.pop %v1576
    %v1578 = vmul.f32 1.0, %v1577
    %v1579 = vtanh.pop %v1565
    %v1580 = vxor.u32 %v1566, 2147483648
    %v1581 = vmul.f32 %v1580, 1.442695
    %v1582 = vpow.pop %v1581
    %v1583 = vadd.f32 %v1582, 1.0
    %v1584 = vrcp.pop %v1583
    %v1585 = vmul.f32 1.0, %v1584
    %v1586 = vmul.f32 %v1578, %v1472
    %v1587 = vmul.f32 %v1572, %v1579
    %v1588 = vadd.f32 %v1586, %v1587
    %v1589 = vtanh.pop %v1588
    %v1590 = vmul.f32 %v1585, %v1589
    %v1591 = vadd.f32 %v1475, %v1590
    %1592 = vst [vmem:[#allocation2] sm:$0xff] %v1590
    %1593 = vst [vmem:[#allocation3] sm:$0xff] %v1588
    %1594 = vst [vmem:[#allocation4] sm:$0xff] %v1591
    // Predicated region
    $region34: #{lstm_net_forward.1} parent=1 // pred_check
      %p1595 = pneg %p38
    $region35: #{lstm_net_forward.1} parent=1 // pred_check_branch
      %1597 = sbr.rel (%p1595) target = $region37
    $region36: #{lstm_net_forward.1} parent=1 // pred_region
      %v1598 = vmul.f32 %v1591, 0.125
      %v1599 = vld [vmem:[%s4] sm:$0xff]
      %v1600 = vld [vmem:[%s4 + $0x8] sm:$0xff]
      %v1601 = vld [vmem:[%s4 + $0x10] sm:$0xff]
      %v1602 = vld [vmem:[%s4 + $0x18] sm:$0xff]
      %v1603 = vld [vmem:[%s4 + $0x20] sm:$0xff]
      %v1604 = vld [vmem:[%s4 + $0x28] sm:$0xff]
      %v1605 = vld [vmem:[%s4 + $0x30] sm:$0xff]
      %v1606 = vld [vmem:[%s4 + $0x38] sm:$0xff]
      %v1607 = vld [vmem:[%s4 + $0x40] sm:$0xff]
      %v1608 = vld [vmem:[%s4 + $0x48] sm:$0xff]
      %v1609 = vld [vmem:[%s4 + $0x50] sm:$0xff]
      %v1610 = vld [vmem:[%s4 + $0x58] sm:$0xff]
      %v1611 = vld [vmem:[%s4 + $0x60] sm:$0xff]
      %v1612 = vld [vmem:[%s4 + $0x68] sm:$0xff]
      %v1613 = vld [vmem:[%s4 + $0x70] sm:$0xff]
      %v1614 = vld [vmem:[%s4 + $0x78] sm:$0xff]
      %v1615 = vld [vmem:[%s5] sm:$0x1]
      %v1617 = vlaneseq
      %v1618 = vshrl.u32 %v1617, 7
      %v1619 = vsub.s32 0, %v1618
      %v1620 = vrot.slane %v1615, %v1619
      %1622 = vmatprep.subr.mxu0 0.0
      %1623 = vmatpush1.msra.mxu0 %v1599
      %1624 = vmatprep.subr.mxu0 0.0
      %1625 = vmatpush1.msra.mxu0 %v1600
      %1626 = vmatprep.subr.mxu0 0.0
      %1627 = vmatpush1.msra.mxu0 %v1601
      %1628 = vmatprep.subr.mxu0 0.0
      %1629 = vmatpush1.msra.mxu0 %v1602
      %1630 = vmatprep.subr.mxu0 0.0
      %1631 = vmatpush1.msra.mxu0 %v1603
      %1632 = vmatprep.subr.mxu0 0.0
      %1633 = vmatpush1.msra.mxu0 %v1604
      %1634 = vmatprep.subr.mxu0 0.0
      %1635 = vmatpush1.msra.mxu0 %v1605
      %1636 = vmatprep.subr.mxu0 0.0
      %1637 = vmatpush1.msra.mxu0 %v1606
      %1638 = vmatprep.subr.mxu0 0.0
      %1639 = vmatpush1.msra.mxu0 %v1607
      %1640 = vmatprep.subr.mxu0 0.0
      %1641 = vmatpush1.msra.mxu0 %v1608
      %1642 = vmatprep.subr.mxu0 0.0
      %1643 = vmatpush1.msra.mxu0 %v1609
      %1644 = vmatprep.subr.mxu0 0.0
      %1645 = vmatpush1.msra.mxu0 %v1610
      %1646 = vmatprep.subr.mxu0 0.0
      %1647 = vmatpush1.msra.mxu0 %v1611
      %1648 = vmatprep.subr.mxu0 0.0
      %1649 = vmatpush1.msra.mxu0 %v1612
      %1650 = vmatprep.subr.mxu0 0.0
      %1651 = vmatpush1.msra.mxu0 %v1613
      %1652 = vmatprep.subr.mxu0 0.0
      %1653 = vmatpush1.msra.mxu0 %v1614
      %1654 = vmatprep.subr.mxu0 0.0
      %1655 = vmatpush1.msra.mxu0 0.0
      %1656 = vmatprep.subr.mxu0 0.0
      %1657 = vmatpush1.msra.mxu0 0.0
      %1658 = vmatprep.subr.mxu0 0.0
      %1659 = vmatpush1.msra.mxu0 0.0
      %1660 = vmatprep.subr.mxu0 0.0
      %1661 = vmatpush1.msra.mxu0 0.0
      %1662 = vmatprep.subr.mxu0 0.0
      %1663 = vmatpush1.msra.mxu0 0.0
      %1664 = vmatprep.subr.mxu0 0.0
      %1665 = vmatpush1.msra.mxu0 0.0
      %1666 = vmatprep.subr.mxu0 0.0
      %1667 = vmatpush1.msra.mxu0 0.0
      %1668 = vmatprep.subr.mxu0 0.0
      %1669 = vmatpush1.msra.mxu0 0.0
      %1670 = vmatprep.subr.mxu0 0.0
      %1671 = vmatpush1.msra.mxu0 0.0
      %1672 = vmatprep.subr.mxu0 0.0
      %1673 = vmatpush1.msra.mxu0 0.0
      %1674 = vmatprep.subr.mxu0 0.0
      %1675 = vmatpush1.msra.mxu0 0.0
      %1676 = vmatprep.subr.mxu0 0.0
      %1677 = vmatpush1.msra.mxu0 0.0
      %1678 = vmatprep.subr.mxu0 0.0
      %1679 = vmatpush1.msra.mxu0 0.0
      %1680 = vmatprep.subr.mxu0 0.0
      %1681 = vmatpush1.msra.mxu0 0.0
      %1682 = vmatprep.subr.mxu0 0.0
      %1683 = vmatpush1.msra.mxu0 0.0
      %1684 = vmatprep.subr.mxu0 0.0
      %1685 = vmatpush1.msra.mxu0 0.0
      %1686 = vmatprep.mubr.f32.mxu0 0.0
      %1687 = vmatmul.mubr.f32.gmra.mrb[0].mxu0 %v1598
      %v1688 = vpop.f32.mrb[0].mxu0
      %v1689 = vadd.f32 %v1620, %v1688
      %v1690 = vpop.f32.mrb[0].mxu0
      %1691 = vdwg.mxu0
      %1692 = vst [vmem:[%s6] sm:$0xff] %v1689
    $region37: #{lstm_net_forward.1} parent=1 // pred_fallthru
      _
    // Predicated region
    $region38: #{lstm_net_forward.1} parent=1 // pred_check
      _
    $region39: #{lstm_net_forward.1} parent=1 // pred_check_branch
      %1694 = sbr.rel (0) target = $region41
    $region40: #{lstm_net_forward.1} parent=1 // pred_region
      _
    $region41: #{lstm_net_forward.1} parent=1 // pred_fallthru
      _
    // Predicated region
    $region42: #{lstm_net_forward.1} parent=1 // pred_check
      _
    $region43: #{lstm_net_forward.1} parent=1 // pred_check_branch
      %1696 = sbr.rel (0) target = $region45
    $region44: #{lstm_net_forward.1} parent=1 // pred_region
      _
    $region45: #{lstm_net_forward.1} parent=1 // pred_fallthru
      _
    %1697 = vsyncpa [#allocation7], 1

</llo_original>
